<compile_context>
chip_gen: v5e
topology: v5e:2x2
jax: 0.10.0
libtpu: 0.0.40
codegen_flags: <defaults>
</compile_context>

<pallas_src>
import functools
import math

import jax
import jax.numpy as jnp
import numpy as np
from jax.experimental import pallas as pl
from jax.experimental.pallas import tpu as pltpu


def _rpe_mha_kernel(q_ref, k_ref, v_ref, emb_ref, w_ref, b_ref, rot_ref,
                    expand_ref, out_ref, *, num_heads, scale):
    """Fused QKV projection + RoPE + per-head softmax attention (one step).

    q_ref/k_ref/v_ref : (1, N, C)    f32  raw module inputs (batch dim kept)
    emb_ref           : (1, N, C//2) f32  raw embed_qk
    w_ref             : (3, C, C)    bf16 packed [Wq^T, Wk^T, Wv^T]
    b_ref             : (3, 1, C)    f32  packed biases
    rot_ref           : (C, C)       bf16 block-diag pairwise rotation (x0,x1)->(-x1,x0)
    expand_ref        : (C//2, C)    f32  0/1 nearest-neighbour x2 upsample matrix
    out_ref           : (N, W)       f32  [hidden (N,C) | attn (N,H*M) | zero pad]
    """
    H = num_heads
    N, C = q_ref.shape[1], q_ref.shape[2]
    M = k_ref.shape[1]
    dph = C // H
    f32 = jnp.float32
    bf16 = jnp.bfloat16

    # Fused linear projections, all heads at once; bf16 operands, f32 accumulate.
    q = jnp.dot(q_ref[0].astype(bf16), w_ref[0], preferred_element_type=f32) + b_ref[0]
    k = jnp.dot(k_ref[0].astype(bf16), w_ref[1], preferred_element_type=f32) + b_ref[1]
    v = jnp.dot(v_ref[0].astype(bf16), w_ref[2], preferred_element_type=f32) + b_ref[2]

    # theta: x2 nearest upsample of embed_qk into the fused head-major layout.
    # Done as a tiny exact f32 matmul (angles may be large, so no bf16 here);
    # cos/sin computed in-kernel on the otherwise-idle EUP.
    theta = jnp.dot(emb_ref[0], expand_ref[...], preferred_element_type=f32)  # (N, C)
    cos_t = jnp.cos(theta)
    sin_t = jnp.sin(theta)

    # RoPE for every head with a single block-diagonal rotation matmul
    # (dph is even so pairs never cross head boundaries).
    rot = rot_ref[...]
    q_rot = jnp.dot(q.astype(bf16), rot, preferred_element_type=f32)
    k_rot = jnp.dot(k.astype(bf16), rot, preferred_element_type=f32)
    q = q * cos_t + q_rot * sin_t
    k = k * cos_t + k_rot * sin_t

    # Fold the 1/sqrt(dph) attention scale into q, then drop to bf16 for the MXU.
    q = (q * scale).astype(bf16)
    k = k.astype(bf16)
    v = v.astype(bf16)

    # Per-head scaled-dot-product attention; H is tiny and static -> unrolled.
    hid_parts = []
    attn_parts = []
    for h in range(H):
        sl = slice(h * dph, (h + 1) * dph)
        qh, kh, vh = q[:, sl], k[:, sl], v[:, sl]
        s = jax.lax.dot_general(qh, kh, (((1,), (1,)), ((), ())),
                                preferred_element_type=f32)            # (N, M) f32
        m = jnp.max(s, axis=-1, keepdims=True)
        e = jnp.exp(s - m)
        p = e * pl.reciprocal(jnp.sum(e, axis=-1, keepdims=True), approx=True)
        attn_parts.append(p)
        hid_parts.append(jnp.dot(p.astype(bf16), vh, preferred_element_type=f32))

    # One lane-dense (multiple-of-128) store: [hidden | attention | zero pad].
    parts = hid_parts + attn_parts
    pad = out_ref.shape[1] - (C + H * M)
    if pad:
        parts.append(jnp.zeros((N, pad), dtype=f32))
    out_ref[...] = jnp.concatenate(parts, axis=-1)


def prepare_rpe_mha_params(params, num_heads):
    """One-time packing of the nn.Linear parameters into kernel-friendly slabs."""
    C = params["wq"].shape[0]
    H = num_heads
    assert C % H == 0
    dph = C // H
    assert dph % 2 == 0, "RoPE pairs must not cross head boundaries"
    f32, bf16 = jnp.float32, jnp.bfloat16

    # nn.Linear: y = x @ W.T + b ; output columns are already head-major (h*dph+d).
    w = jnp.stack([params["wq"].T, params["wk"].T, params["wv"].T]).astype(bf16)   # (3,C,C)
    b = jnp.stack([params["bq"], params["bk"], params["bv"]]
                  ).reshape(3, 1, C).astype(f32)                                   # (3,1,C)

    # Block-diagonal pairwise rotation: (x0, x1) @ [[0,1],[-1,0]] = (-x1, x0).
    # Entries are 0/+-1 -> exact in bf16.
    rot = jnp.kron(jnp.eye(C // 2, dtype=f32),
                   jnp.array([[0.0, 1.0], [-1.0, 0.0]], dtype=f32)).astype(bf16)   # (C,C)

    # 0/1 expansion matrix: theta (N,C) = embed_qk (N,C/2) @ expand.
    # Fused column c = h*dph + r copies embed column h*(dph//2) + r//2
    # (== the 'b m (h c) -> b h m c' rearrange + x2 nearest upsample).
    cols = np.arange(C)
    src = (cols // dph) * (dph // 2) + (cols % dph) // 2
    expand = np.zeros((C // 2, C), np.float32)
    expand[src, cols] = 1.0

    return {"w": w, "b": b, "rot": rot, "expand": jnp.asarray(expand)}


@functools.partial(jax.jit, static_argnames=("num_heads",))
def rpe_multi_head_attention(input_q, input_k, input_v, embed_qk, prepared,
                             num_heads):
    """Forward pass of RPEMultiHeadAttention (dense path, self.k == None).

    Returns (hidden_states (B, N, C), attention_scores (B, H, N, M)).
    """
    # TODO(synk): the top-k sparse path of dynamic_attention (self.k is not None)
    #             needs a per-row scatter by top-k indices and is not implemented.
    B, N, C = input_q.shape
    M = input_k.shape[1]
    H = num_heads
    assert B == 1, "pos_emb.squeeze(0) in the reference module implies B == 1"
    assert M == N, "RoPE theta from embed_qk is shared between q and k"
    assert C % H == 0 and (C // H) % 2 == 0
    f32 = jnp.float32

    out_w = ((C + H * M + 127) // 128) * 128   # lane-dense packed output width
    kernel = functools.partial(_rpe_mha_kernel, num_heads=H,
                               scale=1.0 / math.sqrt(C // H))
    packed = pl.pallas_call(
        kernel,
        out_shape=jax.ShapeDtypeStruct((N, out_w), f32),
        in_specs=[pl.BlockSpec(memory_space=pltpu.MemorySpace.VMEM)] * 8,
        out_specs=pl.BlockSpec(memory_space=pltpu.MemorySpace.VMEM),
    )(input_q, input_k, input_v, embed_qk,
      prepared["w"], prepared["b"], prepared["rot"], prepared["expand"])

    hidden_states = packed[:, :C][None]                                    # (1, N, C)
    attention_scores = (packed[:, C:C + H * M]
                        .reshape(N, H, M).transpose(1, 0, 2))[None]        # (1, H, N, M)
    return hidden_states, attention_scores


def _reference(input_q, input_k, input_v, embed_qk, params, num_heads):
    """Pure-JAX replica of the PyTorch forward (for verification)."""
    B, N, C = input_q.shape
    H = num_heads
    dph = C // H

    def proj(x, w, b):
        y = x @ w.T + b
        return y.reshape(B, N, H, dph).transpose(0, 2, 1, 3)        # b h n c

    q = proj(input_q, params["wq"], params["bq"])
    k = proj(input_k, params["wk"], params["bk"])
    v = proj(input_v, params["wv"], params["bv"])

    e = embed_qk.reshape(B, N, H, dph // 2).transpose(0, 2, 1, 3)   # b h m c/2
    theta = jnp.repeat(e, 2, axis=-1)                               # b h m dph

    def rope(x):
        x2 = x.reshape(B, H, N, dph // 2, 2)
        rot = jnp.stack([-x2[..., 1], x2[..., 0]], axis=-1).reshape(B, H, N, dph)
        return x * jnp.cos(theta) + rot * jnp.sin(theta)

    q = rope(q)
    k = rope(k)
    scores = jnp.einsum("bhnd,bhmd->bhnm", q, k) / dph ** 0.5
    p = jax.nn.softmax(scores, axis=-1)
    hid = jnp.einsum("bhnm,bhmd->bhnd", p, v)
    hid = hid.transpose(0, 2, 1, 3).reshape(B, N, C)
    return hid, p


if __name__ == "__main__":
    B = 1          # module semantics (pos_emb.squeeze(0)) require batch == 1
    N = 16         # num query points (== num key points)
    d_model = 32
    num_heads = 4

    key = jax.random.PRNGKey(0)
    ks = jax.random.split(key, 10)
    scale = 1.0 / math.sqrt(d_model)
    params = {
        "wq": jax.random.normal(ks[0], (d_model, d_model), jnp.float32) * scale,
        "bq": jax.random.normal(ks[1], (d_model,), jnp.float32) * 0.1,
        "wk": jax.random.normal(ks[2], (d_model, d_model), jnp.float32) * scale,
        "bk": jax.random.normal(ks[3], (d_model,), jnp.float32) * 0.1,
        "wv": jax.random.normal(ks[4], (d_model, d_model), jnp.float32) * scale,
        "bv": jax.random.normal(ks[5], (d_model,), jnp.float32) * 0.1,
    }
    input_q = jax.random.normal(ks[6], (B, N, d_model), jnp.float32)
    input_k = jax.random.normal(ks[7], (B, N, d_model), jnp.float32)
    input_v = jax.random.normal(ks[8], (B, N, d_model), jnp.float32)
    embed_qk = jax.random.normal(ks[9], (B, N, d_model // 2), jnp.float32)

    prepared = prepare_rpe_mha_params(params, num_heads)   # one-time packing

    hidden, attn = rpe_multi_head_attention(
        input_q, input_k, input_v, embed_qk, prepared, num_heads=num_heads)
    jax.block_until_ready((hidden, attn))

    ref_hidden, ref_attn = _reference(
        input_q, input_k, input_v, embed_qk, params, num_heads)
    # bf16 operands on the MXU (f32 accumulate) -> slightly looser tolerance.
    np.testing.assert_allclose(np.asarray(hidden), np.asarray(ref_hidden),
                               rtol=2e-2, atol=2e-2)
    np.testing.assert_allclose(np.asarray(attn), np.asarray(ref_attn),
                               rtol=2e-2, atol=2e-2)
    assert hidden.shape == (B, N, d_model)
    assert attn.shape == (B, num_heads, N, N)
    print("KERNEL_OK")
</pallas_src>

<mosaic_0001>
module attributes {stable_mosaic.version = 11 : i64} {
  func.func @_rpe_mha_kernel(%arg0: memref<1x16x32xf32, #tpu.memory_space<vmem>>, %arg1: memref<1x16x32xf32, #tpu.memory_space<vmem>>, %arg2: memref<1x16x32xf32, #tpu.memory_space<vmem>>, %arg3: memref<1x16x16xf32, #tpu.memory_space<vmem>>, %arg4: memref<3x32x32xbf16, #tpu.memory_space<vmem>>, %arg5: memref<3x1x32xf32, #tpu.memory_space<vmem>>, %arg6: memref<32x32xbf16, #tpu.memory_space<vmem>>, %arg7: memref<16x32xf32, #tpu.memory_space<vmem>>, %arg8: memref<16x128xf32, #tpu.memory_space<vmem>>) attributes {dimension_semantics = [], scalar_prefetch = 0 : i64, scratch_operands = 0 : i64, tpu.core_type = #tpu.core_type<tc>} {
    %c0 = arith.constant 0 : index
    %c0_0 = arith.constant 0 : index
    %c0_1 = arith.constant 0 : index
    %0 = vector.load %arg0[%c0, %c0_0, %c0_1] : memref<1x16x32xf32, #tpu.memory_space<vmem>>, vector<1x16x32xf32>
    %1 = vector.shape_cast %0 : vector<1x16x32xf32> to vector<16x32xf32>
    %2 = arith.truncf %1 : vector<16x32xf32> to vector<16x32xbf16>
    %c0_2 = arith.constant 0 : index
    %c0_3 = arith.constant 0 : index
    %c0_4 = arith.constant 0 : index
    %3 = vector.load %arg4[%c0_2, %c0_3, %c0_4] : memref<3x32x32xbf16, #tpu.memory_space<vmem>>, vector<1x32x32xbf16>
    %4 = vector.shape_cast %3 : vector<1x32x32xbf16> to vector<32x32xbf16>
    %cst = arith.constant dense<0.000000e+00> : vector<16x32xf32>
    %5 = tpu.matmul %2, %4, %cst {dimension_numbers = #tpu.dot_dimension_numbers<[1], [0], [0], [1], [0, 0, 1, 1], [], []>} : vector<16x32xbf16>, vector<32x32xbf16>, vector<16x32xf32> -> vector<16x32xf32>
    %c0_5 = arith.constant 0 : index
    %c0_6 = arith.constant 0 : index
    %c0_7 = arith.constant 0 : index
    %6 = vector.load %arg5[%c0_5, %c0_6, %c0_7] : memref<3x1x32xf32, #tpu.memory_space<vmem>>, vector<1x1x32xf32>
    %7 = vector.shape_cast %6 : vector<1x1x32xf32> to vector<1x32xf32>
    %8 = vector.broadcast %7 : vector<1x32xf32> to vector<16x32xf32>
    %9 = arith.addf %5, %8 : vector<16x32xf32>
    %c0_8 = arith.constant 0 : index
    %c0_9 = arith.constant 0 : index
    %c0_10 = arith.constant 0 : index
    %10 = vector.load %arg1[%c0_8, %c0_9, %c0_10] : memref<1x16x32xf32, #tpu.memory_space<vmem>>, vector<1x16x32xf32>
    %11 = vector.shape_cast %10 : vector<1x16x32xf32> to vector<16x32xf32>
    %12 = arith.truncf %11 : vector<16x32xf32> to vector<16x32xbf16>
    %c1 = arith.constant 1 : index
    %c0_11 = arith.constant 0 : index
    %c0_12 = arith.constant 0 : index
    %13 = vector.load %arg4[%c1, %c0_11, %c0_12] : memref<3x32x32xbf16, #tpu.memory_space<vmem>>, vector<1x32x32xbf16>
    %14 = vector.shape_cast %13 : vector<1x32x32xbf16> to vector<32x32xbf16>
    %cst_13 = arith.constant dense<0.000000e+00> : vector<16x32xf32>
    %15 = tpu.matmul %12, %14, %cst_13 {dimension_numbers = #tpu.dot_dimension_numbers<[1], [0], [0], [1], [0, 0, 1, 1], [], []>} : vector<16x32xbf16>, vector<32x32xbf16>, vector<16x32xf32> -> vector<16x32xf32>
    %c1_14 = arith.constant 1 : index
    %c0_15 = arith.constant 0 : index
    %c0_16 = arith.constant 0 : index
    %16 = vector.load %arg5[%c1_14, %c0_15, %c0_16] : memref<3x1x32xf32, #tpu.memory_space<vmem>>, vector<1x1x32xf32>
    %17 = vector.shape_cast %16 : vector<1x1x32xf32> to vector<1x32xf32>
    %18 = vector.broadcast %17 : vector<1x32xf32> to vector<16x32xf32>
    %19 = arith.addf %15, %18 : vector<16x32xf32>
    %c0_17 = arith.constant 0 : index
    %c0_18 = arith.constant 0 : index
    %c0_19 = arith.constant 0 : index
    %20 = vector.load %arg2[%c0_17, %c0_18, %c0_19] : memref<1x16x32xf32, #tpu.memory_space<vmem>>, vector<1x16x32xf32>
    %21 = vector.shape_cast %20 : vector<1x16x32xf32> to vector<16x32xf32>
    %22 = arith.truncf %21 : vector<16x32xf32> to vector<16x32xbf16>
    %c2 = arith.constant 2 : index
    %c0_20 = arith.constant 0 : index
    %c0_21 = arith.constant 0 : index
    %23 = vector.load %arg4[%c2, %c0_20, %c0_21] : memref<3x32x32xbf16, #tpu.memory_space<vmem>>, vector<1x32x32xbf16>
    %24 = vector.shape_cast %23 : vector<1x32x32xbf16> to vector<32x32xbf16>
    %cst_22 = arith.constant dense<0.000000e+00> : vector<16x32xf32>
    %25 = tpu.matmul %22, %24, %cst_22 {dimension_numbers = #tpu.dot_dimension_numbers<[1], [0], [0], [1], [0, 0, 1, 1], [], []>} : vector<16x32xbf16>, vector<32x32xbf16>, vector<16x32xf32> -> vector<16x32xf32>
    %c2_23 = arith.constant 2 : index
    %c0_24 = arith.constant 0 : index
    %c0_25 = arith.constant 0 : index
    %26 = vector.load %arg5[%c2_23, %c0_24, %c0_25] : memref<3x1x32xf32, #tpu.memory_space<vmem>>, vector<1x1x32xf32>
    %27 = vector.shape_cast %26 : vector<1x1x32xf32> to vector<1x32xf32>
    %28 = vector.broadcast %27 : vector<1x32xf32> to vector<16x32xf32>
    %29 = arith.addf %25, %28 : vector<16x32xf32>
    %c0_26 = arith.constant 0 : index
    %c0_27 = arith.constant 0 : index
    %c0_28 = arith.constant 0 : index
    %30 = vector.load %arg3[%c0_26, %c0_27, %c0_28] : memref<1x16x16xf32, #tpu.memory_space<vmem>>, vector<1x16x16xf32>
    %31 = vector.shape_cast %30 : vector<1x16x16xf32> to vector<16x16xf32>
    %c0_29 = arith.constant 0 : index
    %c0_30 = arith.constant 0 : index
    %32 = vector.load %arg7[%c0_29, %c0_30] : memref<16x32xf32, #tpu.memory_space<vmem>>, vector<16x32xf32>
    %cst_31 = arith.constant dense<0.000000e+00> : vector<16x32xf32>
    %33 = tpu.matmul %31, %32, %cst_31 {dimension_numbers = #tpu.dot_dimension_numbers<[1], [0], [0], [1], [0, 0, 1, 1], [], []>} : vector<16x16xf32>, vector<16x32xf32>, vector<16x32xf32> -> vector<16x32xf32>
    %34 = math.cos %33 : vector<16x32xf32>
    %35 = math.sin %33 : vector<16x32xf32>
    %c0_32 = arith.constant 0 : index
    %c0_33 = arith.constant 0 : index
    %36 = vector.load %arg6[%c0_32, %c0_33] : memref<32x32xbf16, #tpu.memory_space<vmem>>, vector<32x32xbf16>
    %37 = arith.truncf %9 : vector<16x32xf32> to vector<16x32xbf16>
    %cst_34 = arith.constant dense<0.000000e+00> : vector<16x32xf32>
    %38 = tpu.matmul %37, %36, %cst_34 {dimension_numbers = #tpu.dot_dimension_numbers<[1], [0], [0], [1], [0, 0, 1, 1], [], []>} : vector<16x32xbf16>, vector<32x32xbf16>, vector<16x32xf32> -> vector<16x32xf32>
    %39 = arith.truncf %19 : vector<16x32xf32> to vector<16x32xbf16>
    %cst_35 = arith.constant dense<0.000000e+00> : vector<16x32xf32>
    %40 = tpu.matmul %39, %36, %cst_35 {dimension_numbers = #tpu.dot_dimension_numbers<[1], [0], [0], [1], [0, 0, 1, 1], [], []>} : vector<16x32xbf16>, vector<32x32xbf16>, vector<16x32xf32> -> vector<16x32xf32>
    %41 = arith.mulf %9, %34 : vector<16x32xf32>
    %42 = arith.mulf %38, %35 : vector<16x32xf32>
    %43 = arith.addf %41, %42 : vector<16x32xf32>
    %44 = arith.mulf %19, %34 : vector<16x32xf32>
    %45 = arith.mulf %40, %35 : vector<16x32xf32>
    %46 = arith.addf %44, %45 : vector<16x32xf32>
    %cst_36 = arith.constant 0.353553385 : f32
    %47 = vector.broadcast %cst_36 : f32 to vector<16x32xf32>
    %48 = arith.mulf %43, %47 : vector<16x32xf32>
    %49 = arith.truncf %48 : vector<16x32xf32> to vector<16x32xbf16>
    %50 = arith.truncf %46 : vector<16x32xf32> to vector<16x32xbf16>
    %51 = arith.truncf %29 : vector<16x32xf32> to vector<16x32xbf16>
    %52 = vector.extract_strided_slice %49 {offsets = [0, 0], sizes = [16, 8], strides = [1, 1]} : vector<16x32xbf16> to vector<16x8xbf16>
    %53 = vector.extract_strided_slice %50 {offsets = [0, 0], sizes = [16, 8], strides = [1, 1]} : vector<16x32xbf16> to vector<16x8xbf16>
    %54 = vector.extract_strided_slice %51 {offsets = [0, 0], sizes = [16, 8], strides = [1, 1]} : vector<16x32xbf16> to vector<16x8xbf16>
    %cst_37 = arith.constant dense<0.000000e+00> : vector<16x16xf32>
    %55 = tpu.matmul %52, %53, %cst_37 {dimension_numbers = #tpu.dot_dimension_numbers<[1], [1], [0], [0], [0, 0, 1, 0], [], []>} : vector<16x8xbf16>, vector<16x8xbf16>, vector<16x16xf32> -> vector<16x16xf32>
    %cst_38 = arith.constant dense<0xFF800000> : vector<16xf32>
    %56 = vector.multi_reduction <maximumf>, %55, %cst_38 [1] : vector<16x16xf32> to vector<16xf32>
    %57 = vector.shape_cast %56 : vector<16xf32> to vector<16x1xf32>
    %58 = vector.broadcast %57 : vector<16x1xf32> to vector<16x16xf32>
    %59 = arith.subf %55, %58 : vector<16x16xf32>
    %60 = math.exp %59 : vector<16x16xf32>
    %cst_39 = arith.constant dense<0.000000e+00> : vector<16xf32>
    %61 = vector.multi_reduction <add>, %60, %cst_39 [1] : vector<16x16xf32> to vector<16xf32>
    %62 = vector.shape_cast %61 : vector<16xf32> to vector<16x1xf32>
    %63 = tpu.reciprocal %62 {approx = true} : vector<16x1xf32> -> vector<16x1xf32>
    %64 = vector.broadcast %63 : vector<16x1xf32> to vector<16x16xf32>
    %65 = arith.mulf %60, %64 : vector<16x16xf32>
    %66 = arith.truncf %65 : vector<16x16xf32> to vector<16x16xbf16>
    %cst_40 = arith.constant dense<0.000000e+00> : vector<16x8xf32>
    %67 = tpu.matmul %66, %54, %cst_40 {dimension_numbers = #tpu.dot_dimension_numbers<[1], [0], [0], [1], [0, 0, 1, 1], [], []>} : vector<16x16xbf16>, vector<16x8xbf16>, vector<16x8xf32> -> vector<16x8xf32>
    %68 = vector.extract_strided_slice %49 {offsets = [0, 8], sizes = [16, 8], strides = [1, 1]} : vector<16x32xbf16> to vector<16x8xbf16>
    %69 = vector.extract_strided_slice %50 {offsets = [0, 8], sizes = [16, 8], strides = [1, 1]} : vector<16x32xbf16> to vector<16x8xbf16>
    %70 = vector.extract_strided_slice %51 {offsets = [0, 8], sizes = [16, 8], strides = [1, 1]} : vector<16x32xbf16> to vector<16x8xbf16>
    %cst_41 = arith.constant dense<0.000000e+00> : vector<16x16xf32>
    %71 = tpu.matmul %68, %69, %cst_41 {dimension_numbers = #tpu.dot_dimension_numbers<[1], [1], [0], [0], [0, 0, 1, 0], [], []>} : vector<16x8xbf16>, vector<16x8xbf16>, vector<16x16xf32> -> vector<16x16xf32>
    %cst_42 = arith.constant dense<0xFF800000> : vector<16xf32>
    %72 = vector.multi_reduction <maximumf>, %71, %cst_42 [1] : vector<16x16xf32> to vector<16xf32>
    %73 = vector.shape_cast %72 : vector<16xf32> to vector<16x1xf32>
    %74 = vector.broadcast %73 : vector<16x1xf32> to vector<16x16xf32>
    %75 = arith.subf %71, %74 : vector<16x16xf32>
    %76 = math.exp %75 : vector<16x16xf32>
    %cst_43 = arith.constant dense<0.000000e+00> : vector<16xf32>
    %77 = vector.multi_reduction <add>, %76, %cst_43 [1] : vector<16x16xf32> to vector<16xf32>
    %78 = vector.shape_cast %77 : vector<16xf32> to vector<16x1xf32>
    %79 = tpu.reciprocal %78 {approx = true} : vector<16x1xf32> -> vector<16x1xf32>
    %80 = vector.broadcast %79 : vector<16x1xf32> to vector<16x16xf32>
    %81 = arith.mulf %76, %80 : vector<16x16xf32>
    %82 = arith.truncf %81 : vector<16x16xf32> to vector<16x16xbf16>
    %cst_44 = arith.constant dense<0.000000e+00> : vector<16x8xf32>
    %83 = tpu.matmul %82, %70, %cst_44 {dimension_numbers = #tpu.dot_dimension_numbers<[1], [0], [0], [1], [0, 0, 1, 1], [], []>} : vector<16x16xbf16>, vector<16x8xbf16>, vector<16x8xf32> -> vector<16x8xf32>
    %84 = vector.extract_strided_slice %49 {offsets = [0, 16], sizes = [16, 8], strides = [1, 1]} : vector<16x32xbf16> to vector<16x8xbf16>
    %85 = vector.extract_strided_slice %50 {offsets = [0, 16], sizes = [16, 8], strides = [1, 1]} : vector<16x32xbf16> to vector<16x8xbf16>
    %86 = vector.extract_strided_slice %51 {offsets = [0, 16], sizes = [16, 8], strides = [1, 1]} : vector<16x32xbf16> to vector<16x8xbf16>
    %cst_45 = arith.constant dense<0.000000e+00> : vector<16x16xf32>
    %87 = tpu.matmul %84, %85, %cst_45 {dimension_numbers = #tpu.dot_dimension_numbers<[1], [1], [0], [0], [0, 0, 1, 0], [], []>} : vector<16x8xbf16>, vector<16x8xbf16>, vector<16x16xf32> -> vector<16x16xf32>
    %cst_46 = arith.constant dense<0xFF800000> : vector<16xf32>
    %88 = vector.multi_reduction <maximumf>, %87, %cst_46 [1] : vector<16x16xf32> to vector<16xf32>
    %89 = vector.shape_cast %88 : vector<16xf32> to vector<16x1xf32>
    %90 = vector.broadcast %89 : vector<16x1xf32> to vector<16x16xf32>
    %91 = arith.subf %87, %90 : vector<16x16xf32>
    %92 = math.exp %91 : vector<16x16xf32>
    %cst_47 = arith.constant dense<0.000000e+00> : vector<16xf32>
    %93 = vector.multi_reduction <add>, %92, %cst_47 [1] : vector<16x16xf32> to vector<16xf32>
    %94 = vector.shape_cast %93 : vector<16xf32> to vector<16x1xf32>
    %95 = tpu.reciprocal %94 {approx = true} : vector<16x1xf32> -> vector<16x1xf32>
    %96 = vector.broadcast %95 : vector<16x1xf32> to vector<16x16xf32>
    %97 = arith.mulf %92, %96 : vector<16x16xf32>
    %98 = arith.truncf %97 : vector<16x16xf32> to vector<16x16xbf16>
    %cst_48 = arith.constant dense<0.000000e+00> : vector<16x8xf32>
    %99 = tpu.matmul %98, %86, %cst_48 {dimension_numbers = #tpu.dot_dimension_numbers<[1], [0], [0], [1], [0, 0, 1, 1], [], []>} : vector<16x16xbf16>, vector<16x8xbf16>, vector<16x8xf32> -> vector<16x8xf32>
    %100 = vector.extract_strided_slice %49 {offsets = [0, 24], sizes = [16, 8], strides = [1, 1]} : vector<16x32xbf16> to vector<16x8xbf16>
    %101 = vector.extract_strided_slice %50 {offsets = [0, 24], sizes = [16, 8], strides = [1, 1]} : vector<16x32xbf16> to vector<16x8xbf16>
    %102 = vector.extract_strided_slice %51 {offsets = [0, 24], sizes = [16, 8], strides = [1, 1]} : vector<16x32xbf16> to vector<16x8xbf16>
    %cst_49 = arith.constant dense<0.000000e+00> : vector<16x16xf32>
    %103 = tpu.matmul %100, %101, %cst_49 {dimension_numbers = #tpu.dot_dimension_numbers<[1], [1], [0], [0], [0, 0, 1, 0], [], []>} : vector<16x8xbf16>, vector<16x8xbf16>, vector<16x16xf32> -> vector<16x16xf32>
    %cst_50 = arith.constant dense<0xFF800000> : vector<16xf32>
    %104 = vector.multi_reduction <maximumf>, %103, %cst_50 [1] : vector<16x16xf32> to vector<16xf32>
    %105 = vector.shape_cast %104 : vector<16xf32> to vector<16x1xf32>
    %106 = vector.broadcast %105 : vector<16x1xf32> to vector<16x16xf32>
    %107 = arith.subf %103, %106 : vector<16x16xf32>
    %108 = math.exp %107 : vector<16x16xf32>
    %cst_51 = arith.constant dense<0.000000e+00> : vector<16xf32>
    %109 = vector.multi_reduction <add>, %108, %cst_51 [1] : vector<16x16xf32> to vector<16xf32>
    %110 = vector.shape_cast %109 : vector<16xf32> to vector<16x1xf32>
    %111 = tpu.reciprocal %110 {approx = true} : vector<16x1xf32> -> vector<16x1xf32>
    %112 = vector.broadcast %111 : vector<16x1xf32> to vector<16x16xf32>
    %113 = arith.mulf %108, %112 : vector<16x16xf32>
    %114 = arith.truncf %113 : vector<16x16xf32> to vector<16x16xbf16>
    %cst_52 = arith.constant dense<0.000000e+00> : vector<16x8xf32>
    %115 = tpu.matmul %114, %102, %cst_52 {dimension_numbers = #tpu.dot_dimension_numbers<[1], [0], [0], [1], [0, 0, 1, 1], [], []>} : vector<16x16xbf16>, vector<16x8xbf16>, vector<16x8xf32> -> vector<16x8xf32>
    %cst_53 = arith.constant 0.000000e+00 : f32
    %116 = vector.broadcast %cst_53 : f32 to vector<16x32xf32>
    %117 = tpu.concatenate %67, %83, %99, %115, %65, %81, %97, %113, %116 in 1 : vector<16x8xf32>, vector<16x8xf32>, vector<16x8xf32>, vector<16x8xf32>, vector<16x16xf32>, vector<16x16xf32>, vector<16x16xf32>, vector<16x16xf32>, vector<16x32xf32> -> vector<16x128xf32>
    %c0_54 = arith.constant 0 : index
    %c0_55 = arith.constant 0 : index
    %118 = vector.load %arg8[%c0_54, %c0_55] : memref<16x128xf32, #tpu.memory_space<vmem>>, vector<16x128xf32>
    tpu.vector_store %arg8[%c0_54, %c0_55], %117 {strides = array<i32>} : memref<16x128xf32, #tpu.memory_space<vmem>>, vector<16x128xf32>,
    return
  }
}

</mosaic_0001>

<llo_original>
// kernel: rpe_multi_head_attention.1
$region0: #{rpe_multi_head_attention.1}
  #allocation0 [shape = 'u32[]', space=smem, size = 0x4, offset = 0x4, fixed_abs, tag = 'smem constant byte address 0x4 - core index']
  #allocation1 [shape = 'u32[72,128]{1,0:T(1,128)}', space=vmem, size = 0x9000, scoped, tag = 'internal scratch']
  %s0 = inlined_call_operand.hbm [shape: f32[1,16,32], index: 0, kind: input, shape index: {}]
  %s1 = inlined_call_operand.hbm [shape: f32[1,16,32], index: 1, kind: input, shape index: {}]
  %s2 = inlined_call_operand.hbm [shape: f32[1,16,32], index: 2, kind: input, shape index: {}]
  %s3 = inlined_call_operand.hbm [shape: f32[1,16,16], index: 3, kind: input, shape index: {}]
  %s4 = inlined_call_operand.hbm [shape: bf16[3,32,32], index: 4, kind: input, shape index: {}]
  %s5 = inlined_call_operand.vmem [shape: f32[3,1,32], index: 5, kind: input, shape index: {}]
  %s6 = inlined_call_operand.hbm [shape: bf16[32,32], index: 6, kind: input, shape index: {}]
  %s7 = inlined_call_operand.hbm [shape: f32[16,32], index: 7, kind: input, shape index: {}]
  %s8 = inlined_call_operand.vmem [shape: f32[16,128], index: 8, kind: output, shape index: {}]
  %s9 = sld [smem:[#allocation0]]
  $region70: #{rpe_multi_head_attention.1} parent=0
    _
  %s11 = ssub.s32 1, %s9
  %s12 = scalar_select 0, %s11, %s9
  $region1: #{rpe_multi_head_attention.1} parent=0
    #allocation2 [shape = 'u8[8192]{0}', space=vmem, size = 0x2000, scoped, tag = 'input window, operand 0, single buffered']
    #allocation3 [shape = 's32[1]{0}', space=sflag, size = 0x4, scoped, tag = 'scoped memory for rpe_multi_head_attention.1']
    #allocation4 [shape = 'u8[8192]{0}', space=vmem, size = 0x2000, scoped, tag = 'input window, operand 1, single buffered']
    #allocation5 [shape = 's32[1]{0}', space=sflag, size = 0x4, scoped, tag = 'scoped memory for rpe_multi_head_attention.1']
    #allocation6 [shape = 'u8[8192]{0}', space=vmem, size = 0x2000, scoped, tag = 'input window, operand 2, single buffered']
    #allocation7 [shape = 'u8[8192]{0}', space=vmem, size = 0x2000, scoped, tag = 'input window, operand 3, single buffered']
    #allocation8 [shape = 's32[1]{0}', space=sflag, size = 0x4, scoped, tag = 'scoped memory for rpe_multi_head_attention.1']
    #allocation9 [shape = 'u8[24576]{0}', space=vmem, size = 0x6000, scoped, tag = 'input window, operand 4, single buffered']
    #allocation10 [shape = 'u8[8192]{0}', space=vmem, size = 0x2000, scoped, tag = 'input window, operand 6, single buffered']
    #allocation11 [shape = 's32[1]{0}', space=sflag, size = 0x4, scoped, tag = 'scoped memory for rpe_multi_head_attention.1']
    #allocation12 [shape = 'u8[8192]{0}', space=vmem, size = 0x2000, scoped, tag = 'input window, operand 7, single buffered']
    %13 = vsyncpa [#allocation3], 0
    %14 = vsyncpa [#allocation5], 0
    %15 = vsyncpa [#allocation8], 0
    %16 = vsyncpa [#allocation11], 0
    // Predicated region
    $region2: #{rpe_multi_head_attention.1} parent=1 // pred_check
      _
    $region3: #{rpe_multi_head_attention.1} parent=1 // pred_check_branch
      %18 = sbr.rel (0) target = $region5
    $region4: #{rpe_multi_head_attention.1} parent=1 // pred_region
      %20 = vsyncadd [#allocation3], 0
      %s21 = sshll.u32 %s0, 4
      %s22 = int_to_ptr.hbm [resolvable:$true] %s21
      %s23 = sshll.u32 [#allocation2], 4
      %s24 = int_to_ptr.vmem [resolvable:$true] %s23
      %29 = dma.hbm_to_vmem [thread:$0]  %s22, 256, %s24, [#allocation3], 128, 128, 8
    $region5: #{rpe_multi_head_attention.1} parent=1 // pred_fallthru
      _
    // Predicated region
    $region6: #{rpe_multi_head_attention.1} parent=1 // pred_check
      _
    $region7: #{rpe_multi_head_attention.1} parent=1 // pred_check_branch
      %31 = sbr.rel (0) target = $region9
    $region8: #{rpe_multi_head_attention.1} parent=1 // pred_region
      %33 = vsyncadd [#allocation5], 0
      %s34 = sshll.u32 %s1, 4
      %s35 = int_to_ptr.hbm [resolvable:$true] %s34
      %s36 = sshll.u32 [#allocation4], 4
      %s37 = int_to_ptr.vmem [resolvable:$true] %s36
      %42 = dma.hbm_to_vmem [thread:$0]  %s35, 256, %s37, [#allocation5], 128, 128, 8
    $region9: #{rpe_multi_head_attention.1} parent=1 // pred_fallthru
      _
    // Predicated region
    $region10: #{rpe_multi_head_attention.1} parent=1 // pred_check
      _
    $region11: #{rpe_multi_head_attention.1} parent=1 // pred_check_branch
      %44 = sbr.rel (0) target = $region13
    $region12: #{rpe_multi_head_attention.1} parent=1 // pred_region
      %46 = vsyncadd [#allocation5], 0
      %s47 = sshll.u32 %s2, 4
      %s48 = int_to_ptr.hbm [resolvable:$true] %s47
      %s49 = sshll.u32 [#allocation6], 4
      %s50 = int_to_ptr.vmem [resolvable:$true] %s49
      %55 = dma.hbm_to_vmem [thread:$0]  %s48, 256, %s50, [#allocation5], 128, 128, 8
    $region13: #{rpe_multi_head_attention.1} parent=1 // pred_fallthru
      _
    // Predicated region
    $region14: #{rpe_multi_head_attention.1} parent=1 // pred_check
      _
    $region15: #{rpe_multi_head_attention.1} parent=1 // pred_check_branch
      %57 = sbr.rel (0) target = $region17
    $region16: #{rpe_multi_head_attention.1} parent=1 // pred_region
      %59 = vsyncadd [#allocation8], 0
      %s60 = sshll.u32 %s3, 4
      %s61 = int_to_ptr.hbm [resolvable:$true] %s60
      %s62 = sshll.u32 [#allocation7], 4
      %s63 = int_to_ptr.vmem [resolvable:$true] %s62
      %68 = dma.hbm_to_vmem [thread:$0]  %s61, 256, %s63, [#allocation8], 128, 128, 8
    $region17: #{rpe_multi_head_attention.1} parent=1 // pred_fallthru
      _
    // Predicated region
    $region18: #{rpe_multi_head_attention.1} parent=1 // pred_check
      _
    $region19: #{rpe_multi_head_attention.1} parent=1 // pred_check_branch
      %70 = sbr.rel (0) target = $region21
    $region20: #{rpe_multi_head_attention.1} parent=1 // pred_region
      %72 = vsyncadd [#allocation8], 0
      %s73 = sshll.u32 %s4, 4
      %s74 = int_to_ptr.hbm [resolvable:$true] %s73
      %s75 = sshll.u32 [#allocation9], 4
      %s76 = int_to_ptr.vmem [resolvable:$true] %s75
      %81 = dma.hbm_to_vmem [thread:$0]  %s74, 768, %s76, [#allocation8], 64, 64, 4
    $region21: #{rpe_multi_head_attention.1} parent=1 // pred_fallthru
      _
    // Predicated region
    $region22: #{rpe_multi_head_attention.1} parent=1 // pred_check
      _
    $region23: #{rpe_multi_head_attention.1} parent=1 // pred_check_branch
      %83 = sbr.rel (0) target = $region25
    $region24: #{rpe_multi_head_attention.1} parent=1 // pred_region
      _
    $region25: #{rpe_multi_head_attention.1} parent=1 // pred_fallthru
      _
    // Predicated region
    $region26: #{rpe_multi_head_attention.1} parent=1 // pred_check
      _
    $region27: #{rpe_multi_head_attention.1} parent=1 // pred_check_branch
      %85 = sbr.rel (0) target = $region29
    $region28: #{rpe_multi_head_attention.1} parent=1 // pred_region
      %87 = vsyncadd [#allocation11], 0
      %s88 = sshll.u32 %s6, 4
      %s89 = int_to_ptr.hbm [resolvable:$true] %s88
      %s90 = sshll.u32 [#allocation10], 4
      %s91 = int_to_ptr.vmem [resolvable:$true] %s90
      %96 = dma.hbm_to_vmem [thread:$0]  %s89, 256, %s91, [#allocation11], 64, 64, 4
    $region29: #{rpe_multi_head_attention.1} parent=1 // pred_fallthru
      _
    // Predicated region
    $region30: #{rpe_multi_head_attention.1} parent=1 // pred_check
      _
    $region31: #{rpe_multi_head_attention.1} parent=1 // pred_check_branch
      %98 = sbr.rel (0) target = $region33
    $region32: #{rpe_multi_head_attention.1} parent=1 // pred_region
      %100 = vsyncadd [#allocation11], 0
      %s101 = sshll.u32 %s7, 4
      %s102 = int_to_ptr.hbm [resolvable:$true] %s101
      %s103 = sshll.u32 [#allocation12], 4
      %s104 = int_to_ptr.vmem [resolvable:$true] %s103
      %109 = dma.hbm_to_vmem [thread:$0]  %s102, 256, %s104, [#allocation11], 128, 128, 8
    $region33: #{rpe_multi_head_attention.1} parent=1 // pred_fallthru
      _
    // Predicated region
    $region34: #{rpe_multi_head_attention.1} parent=1 // pred_check
      _
    $region35: #{rpe_multi_head_attention.1} parent=1 // pred_check_branch
      %111 = sbr.rel (0) target = $region37
    $region36: #{rpe_multi_head_attention.1} parent=1 // pred_region
      %113 = dma.done [#allocation3], 256
    $region37: #{rpe_multi_head_attention.1} parent=1 // pred_fallthru
      _
    // Predicated region
    $region38: #{rpe_multi_head_attention.1} parent=1 // pred_check
      _
    $region39: #{rpe_multi_head_attention.1} parent=1 // pred_check_branch
      %115 = sbr.rel (0) target = $region41
    $region40: #{rpe_multi_head_attention.1} parent=1 // pred_region
      %117 = dma.done [#allocation5], 256
    $region41: #{rpe_multi_head_attention.1} parent=1 // pred_fallthru
      _
    // Predicated region
    $region42: #{rpe_multi_head_attention.1} parent=1 // pred_check
      _
    $region43: #{rpe_multi_head_attention.1} parent=1 // pred_check_branch
      %119 = sbr.rel (0) target = $region45
    $region44: #{rpe_multi_head_attention.1} parent=1 // pred_region
      %121 = dma.done [#allocation5], 256
    $region45: #{rpe_multi_head_attention.1} parent=1 // pred_fallthru
      _
    // Predicated region
    $region46: #{rpe_multi_head_attention.1} parent=1 // pred_check
      _
    $region47: #{rpe_multi_head_attention.1} parent=1 // pred_check_branch
      %123 = sbr.rel (0) target = $region49
    $region48: #{rpe_multi_head_attention.1} parent=1 // pred_region
      %125 = dma.done [#allocation8], 256
    $region49: #{rpe_multi_head_attention.1} parent=1 // pred_fallthru
      _
    // Predicated region
    $region50: #{rpe_multi_head_attention.1} parent=1 // pred_check
      _
    $region51: #{rpe_multi_head_attention.1} parent=1 // pred_check_branch
      %127 = sbr.rel (0) target = $region53
    $region52: #{rpe_multi_head_attention.1} parent=1 // pred_region
      %129 = dma.done [#allocation8], 768
    $region53: #{rpe_multi_head_attention.1} parent=1 // pred_fallthru
      _
    // Predicated region
    $region54: #{rpe_multi_head_attention.1} parent=1 // pred_check
      _
    $region55: #{rpe_multi_head_attention.1} parent=1 // pred_check_branch
      %131 = sbr.rel (0) target = $region57
    $region56: #{rpe_multi_head_attention.1} parent=1 // pred_region
      %133 = dma.done [#allocation11], 256
    $region57: #{rpe_multi_head_attention.1} parent=1 // pred_fallthru
      _
    // Predicated region
    $region58: #{rpe_multi_head_attention.1} parent=1 // pred_check
      _
    $region59: #{rpe_multi_head_attention.1} parent=1 // pred_check_branch
      %135 = sbr.rel (0) target = $region61
    $region60: #{rpe_multi_head_attention.1} parent=1 // pred_region
      %137 = dma.done [#allocation11], 256
    $region61: #{rpe_multi_head_attention.1} parent=1 // pred_fallthru
      _
    %v139 = vld [vmem:[#allocation2] sm:$0xff]
    %v140 = vld [vmem:[#allocation2 + $0x8] sm:$0xff]
    %v141 = vpack.c.bf16 %v140, %v139
    %v142 = vld [vmem:[#allocation9] sm:$0xf]
    %v143 = vld [vmem:[#allocation9 + $0x4] sm:$0xf]
    %v144 = vld [vmem:[#allocation9 + $0x8] sm:$0xf]
    %v145 = vld [vmem:[#allocation9 + $0xc] sm:$0xf]
    %v146 = vld [vmem:[%s5] sm:$0x1]
    %v148 = vperm.slane %v146, 0
    %v154 = vunpack.c.l.b16 %v142
    %v155 = vunpack.c.l.b16 %v143
    %v156 = vunpack.c.l.b16 %v144
    %v157 = vunpack.c.l.b16 %v145
    %v158 = vpack.c.b16 %v155, %v154
    %v159 = vpack.c.b16 %v157, %v156
    %vm162 = vcmask 261120
    %v164 = vsel %vm162, %v141, 0
    %166 = vmatpush.bf16.msra.mxu0 0
    %167 = vmatpush.bf16.msra.mxu0 0
    %168 = vmatpush.bf16.msra.mxu0 0
    %169 = vmatpush.bf16.msra.mxu0 0
    %170 = vmatpush.bf16.msra.mxu0 0
    %171 = vmatpush.bf16.msra.mxu0 0
    %172 = vmatpush.bf16.msra.mxu0 %v159
    %173 = vmatpush.bf16.msra.mxu0 %v158
    %174 = vmatmul.bf16.gmra.mxu0 %v164
    %v175 = vpop.f32.mrf.mxu0
    %v176 = vadd.f32 %v148, %v175
    %v177 = vpop.f32.mrf.mxu0
    %v178 = vadd.f32 %v148, %v177
    %179 = vdwg.mxu0
    %v180 = vld [vmem:[#allocation4] sm:$0xff]
    %v181 = vld [vmem:[#allocation4 + $0x8] sm:$0xff]
    %v182 = vpack.c.bf16 %v181, %v180
    %s183 = scalar_lea.vmem [#allocation9], 16
    %v184 = vld [vmem:[%s183] sm:$0xf]
    %v185 = vld [vmem:[%s183 + $0x4] sm:$0xf]
    %v186 = vld [vmem:[%s183 + $0x8] sm:$0xf]
    %v187 = vld [vmem:[%s183 + $0xc] sm:$0xf]
    %s188 = scalar_lea.vmem %s5, 1
    %v189 = vld [vmem:[%s188] sm:$0x1]
    %v191 = vperm.slane %v189, 0
    %v197 = vunpack.c.l.b16 %v184
    %v198 = vunpack.c.l.b16 %v185
    %v199 = vunpack.c.l.b16 %v186
    %v200 = vunpack.c.l.b16 %v187
    %v201 = vpack.c.b16 %v198, %v197
    %v202 = vpack.c.b16 %v200, %v199
    %v206 = vsel %vm162, %v182, 0
    %208 = vmatpush.bf16.msra.mxu0 0
    %209 = vmatpush.bf16.msra.mxu0 0
    %210 = vmatpush.bf16.msra.mxu0 0
    %211 = vmatpush.bf16.msra.mxu0 0
    %212 = vmatpush.bf16.msra.mxu0 0
    %213 = vmatpush.bf16.msra.mxu0 0
    %214 = vmatpush.bf16.msra.mxu0 %v202
    %215 = vmatpush.bf16.msra.mxu0 %v201
    %216 = vmatmul.bf16.gmra.mxu0 %v206
    %v217 = vpop.f32.mrf.mxu0
    %v218 = vadd.f32 %v191, %v217
    %v219 = vpop.f32.mrf.mxu0
    %v220 = vadd.f32 %v191, %v219
    %221 = vdwg.mxu0
    %v222 = vld [vmem:[#allocation6] sm:$0xff]
    %v223 = vld [vmem:[#allocation6 + $0x8] sm:$0xff]
    %v224 = vpack.c.bf16 %v223, %v222
    %s225 = scalar_lea.vmem [#allocation9], 32
    %v226 = vld [vmem:[%s225] sm:$0xf]
    %v227 = vld [vmem:[%s225 + $0x4] sm:$0xf]
    %v228 = vld [vmem:[%s225 + $0x8] sm:$0xf]
    %v229 = vld [vmem:[%s225 + $0xc] sm:$0xf]
    %s230 = scalar_lea.vmem %s5, 2
    %v231 = vld [vmem:[%s230] sm:$0x1]
    %v233 = vperm.slane %v231, 0
    %v239 = vunpack.c.l.b16 %v226
    %v240 = vunpack.c.l.b16 %v227
    %v241 = vunpack.c.l.b16 %v228
    %v242 = vunpack.c.l.b16 %v229
    %v243 = vpack.c.b16 %v240, %v239
    %v244 = vpack.c.b16 %v242, %v241
    %v248 = vsel %vm162, %v224, 0
    %250 = vmatpush.bf16.msra.mxu0 0
    %251 = vmatpush.bf16.msra.mxu0 0
    %252 = vmatpush.bf16.msra.mxu0 0
    %253 = vmatpush.bf16.msra.mxu0 0
    %254 = vmatpush.bf16.msra.mxu0 0
    %255 = vmatpush.bf16.msra.mxu0 0
    %256 = vmatpush.bf16.msra.mxu0 %v244
    %257 = vmatpush.bf16.msra.mxu0 %v243
    %258 = vmatmul.bf16.gmra.mxu0 %v248
    %v259 = vpop.f32.mrf.mxu0
    %v260 = vadd.f32 %v233, %v259
    %v261 = vpop.f32.mrf.mxu0
    %v262 = vadd.f32 %v233, %v261
    %263 = vdwg.mxu0
    %v264 = vld [vmem:[#allocation7] sm:$0xff]
    %v265 = vld [vmem:[#allocation7 + $0x8] sm:$0xff]
    %v266 = vld [vmem:[#allocation12] sm:$0xff]
    %v267 = vld [vmem:[#allocation12 + $0x8] sm:$0xff]
    %vm268 = vcmask 130048
    %v270 = vsel %vm268, %v264, 0
    %v273 = vsel %vm268, %v265, 0
    %275 = vmatpush.msra.mxu0 0.0
    %276 = vmatpush.msra.mxu0 0.0
    %277 = vmatpush.msra.mxu0 0.0
    %278 = vmatpush.msra.mxu0 0.0
    %279 = vmatpush.msra.mxu0 0.0
    %280 = vmatpush.msra.mxu0 0.0
    %281 = vmatpush.msra.mxu0 0.0
    %282 = vmatpush.msra.mxu0 0.0
    %283 = vmatpush.msra.mxu0 0.0
    %284 = vmatpush.msra.mxu0 0.0
    %285 = vmatpush.msra.mxu0 0.0
    %286 = vmatpush.msra.mxu0 0.0
    %287 = vmatpush.msra.mxu0 0.0
    %288 = vmatpush.msra.mxu0 0.0
    %289 = vmatpush.msra.mxu0 %v267
    %290 = vmatpush.msra.mxu0 %v266
    %291 = vmatmul.f32.gmra.mxu0 %v270
    %v292 = vpop.f32.mrf.mxu0
    %v293 = vadd.f32 0.0, %v292
    %294 = vmatmul.f32.gmra.mxu0 %v273
    %v295 = vpop.f32.mrf.mxu0
    %v296 = vadd.f32 0.0, %v295
    %297 = vdwg.mxu0
    %v298 = vand.u32 2147483647, %v293
    %vm299 = vcmp.le.f32.partialorder %v298, 0.7853982
    %vm300 = vcmp.lt.s32.totalorder %v293, 0
    %v301 = vand.u32 %v293, 2139095040
    %v302 = vshrl.u32 %v301, 23
    %v303 = vsub.s32 %v302, 127
    %v304 = vand.u32 2147483647, %v293
    %v305 = vand.u32 %v304, 8388607
    %v306 = vor.u32 %v305, 8388608
    %v307 = vsub.s32 0, %v306
    %v308 = vadd.s32 %v303, 1
    %vm309 = vcmp.gt.s32.totalorder %v308, 0
    %v310 = vsel %vm309, %v308, 0
    %v311 = vshrl.u32 %v310, 5
    %v312 = vand.u32 %v310, 31
    %v313 = vsub.s32 32, %v312
    %v314 = vshrl.u32 683565275, %v313
    %v315 = vshll.u32 683565275, %v312
    %v316 = vshrl.u32 2475754826, %v313
    %v317 = vor.u32 %v315, %v316
    %v318 = vshll.u32 2475754826, %v312
    %v319 = vshrl.u32 2131351028, %v313
    %v320 = vor.u32 %v318, %v319
    %v321 = vshll.u32 2131351028, %v312
    %v322 = vshrl.u32 2102212464, %v313
    %v323 = vor.u32 %v321, %v322
    %v324 = vshll.u32 2102212464, %v312
    %v325 = vshrl.u32 920167782, %v313
    %v326 = vor.u32 %v324, %v325
    %v327 = vshll.u32 920167782, %v312
    %v328 = vshrl.u32 1326507024, %v313
    %v329 = vor.u32 %v327, %v328
    %vm330 = vcmp.lt.s32.totalorder %v311, 1
    %vm331 = vcmp.lt.s32.totalorder %v311, 2
    %vm332 = vcmp.lt.s32.totalorder %v311, 3
    %vm333 = vcmp.lt.s32.totalorder %v311, 4
    %v334 = vsel %vm330, %v314, %v317
    %v335 = vsel %vm333, %v323, 2102212464
    %v336 = vsel %vm332, %v320, %v335
    %v337 = vsel %vm331, %v334, %v336
    %v338 = vsel %vm330, %v317, %v320
    %v339 = vsel %vm333, %v326, 920167782
    %v340 = vsel %vm332, %v323, %v339
    %v341 = vsel %vm331, %v338, %v340
    %v342 = vsel %vm330, %v320, %v323
    %v343 = vsel %vm333, %v329, 1326507024
    %v344 = vsel %vm332, %v326, %v343
    %v345 = vsel %vm331, %v342, %v344
    %v346 = vshll.u32 %v306, 8
    %v347 = vand.u32 %v346, 65535
    %v348 = vshrl.u32 %v346, 16
    %v349 = vand.u32 %v345, 65535
    %v350 = vshrl.u32 %v345, 16
    %v351 = vmul.u32 %v347, %v349
    %v352 = vmul.u32 %v347, %v350
    %v353 = vmul.u32 %v348, %v349
    %v354 = vmul.u32 %v348, %v350
    %v355 = vshll.u32 %v352, 16
    %v356 = vshrl.u32 %v352, 16
    %v357 = vshll.u32 %v353, 16
    %v358 = vshrl.u32 %v353, 16
    %vm359 = vc.u32 %v351, %v355
    %v360 = vsel %vm359, 1, 0
    %v361 = vadd.s32 %v351, %v355
    %v362 = vadd.s32 %v354, %v360
    %vm363 = vc.u32 %v361, %v357
    %v364 = vsel %vm363, 1, 0
    %v365 = vadd.s32 %v361, %v357
    %v366 = vadd.s32 %v362, %v364
    %v367 = vadd.s32 %v366, %v356
    %v368 = vadd.s32 %v367, %v358
    %v369 = vand.u32 %v346, 65535
    %v370 = vshrl.u32 %v346, 16
    %v371 = vand.u32 %v341, 65535
    %v372 = vshrl.u32 %v341, 16
    %v373 = vmul.u32 %v369, %v371
    %v374 = vmul.u32 %v369, %v372
    %v375 = vmul.u32 %v370, %v371
    %v376 = vmul.u32 %v370, %v372
    %v377 = vshll.u32 %v374, 16
    %v378 = vshrl.u32 %v374, 16
    %v379 = vshll.u32 %v375, 16
    %v380 = vshrl.u32 %v375, 16
    %vm381 = vc.u32 %v373, %v377
    %v382 = vsel %vm381, 1, 0
    %v383 = vadd.s32 %v373, %v377
    %v384 = vadd.s32 %v376, %v382
    %vm385 = vc.u32 %v383, %v379
    %v386 = vsel %vm385, 1, 0
    %v387 = vadd.s32 %v383, %v379
    %v388 = vadd.s32 %v384, %v386
    %v389 = vadd.s32 %v388, %v378
    %v390 = vadd.s32 %v389, %v380
    %v391 = vmul.u32 %v346, %v337
    %v392 = vadd.s32 %v368, %v387
    %vm393 = vc.u32 %v368, %v387
    %v394 = vadd.s32 %v390, 1
    %v395 = vsel %vm393, %v394, %v390
    %v396 = vadd.s32 %v391, %v395
    %v397 = vadd.s32 %v396, 536870912
    %v398 = vshrl.u32 %v397, 30
    %v399 = vshll.u32 %v398, 30
    %v400 = vsub.s32 %v396, %v399
    %vm401 = vcmp.lt.s32.totalorder %v400, 0
    %v402 = vsub.s32 0, %v400
    %v403 = vsel %vm401, %v402, %v400
    %v404 = vclz %v403
    %v405 = vsub.s32 %v404, 2
    %vm406 = vcmp.gt.s32.totalorder 0, %v405
    %v407 = vsel %vm406, 0, %v405
    %v408 = vsub.s32 32, %v407
    %v409 = vshll.u32 %v400, %v407
    %v410 = vshrl.u32 %v392, %v408
    %v411 = vor.u32 %v409, %v410
    %v412 = vsub.s32 4294967266, %v407
    %v413 = vadd.s32 %v412, 127
    %v414 = vshll.u32 %v413, 23
    %v415 = vor.u32 4788187, %v414
    %v416 = vand.u32 2147483647, %v415
    %v418 = vcvt.s32.f32 %v411
    %v419 = vmul.f32 %v418, %v416
    %v420 = vxor.u32 %v419, 2147483648
    %v421 = vsel %vm300, %v420, %v419
    %v422 = vsub.s32 4, %v398
    %v423 = vsel %vm300, %v422, %v398
    %v424 = vsel %vm299, %v293, %v421
    %v425 = vsel %vm299, 0, %v423
    %v426 = vmul.f32 %v424, %v424
    %v427 = vmul.f32 %v426, -0.001358992
    %v428 = vadd.f32 %v427, 0.041655596
    %v429 = vmul.f32 %v426, %v428
    %v430 = vadd.f32 %v429, -0.4999988
    %v431 = vmul.f32 %v426, %v430
    %v432 = vadd.f32 1.0, %v431
    %v433 = vmul.f32 %v424, %v424
    %v434 = vmul.f32 %v433, -0.00019511016
    %v435 = vadd.f32 %v434, 0.008332121
    %v436 = vmul.f32 %v433, %v435
    %v437 = vadd.f32 %v436, -0.16666654
    %v438 = vmul.f32 %v433, %v437
    %v439 = vadd.f32 %v438, 1.0
    %v440 = vmul.f32 %v439, %v424
    %vm441 = vweird.f32 %v293
    %v442 = vand.u32 %v425, 3
    %vm443 = vcmp.lt.s32.totalorder %v442, 2
    %vm444 = vcmp.eq.s32.totalorder %v442, 0
    %v445 = vxor.u32 %v440, 2147483648
    %v446 = vsel %vm444, %v432, %v445
    %vm447 = vcmp.eq.s32.totalorder %v442, 2
    %v448 = vxor.u32 %v432, 2147483648
    %v449 = vsel %vm447, %v448, %v440
    %v450 = vsel %vm443, %v446, %v449
    %v451 = vsel %vm441, nan, %v450
    %v452 = vand.u32 2147483647, %v296
    %vm453 = vcmp.le.f32.partialorder %v452, 0.7853982
    %vm454 = vcmp.lt.s32.totalorder %v296, 0
    %v455 = vand.u32 %v296, 2139095040
    %v456 = vshrl.u32 %v455, 23
    %v457 = vsub.s32 %v456, 127
    %v458 = vand.u32 2147483647, %v296
    %v459 = vand.u32 %v458, 8388607
    %v460 = vor.u32 %v459, 8388608
    %v461 = vsub.s32 0, %v460
    %v462 = vadd.s32 %v457, 1
    %vm463 = vcmp.gt.s32.totalorder %v462, 0
    %v464 = vsel %vm463, %v462, 0
    %v465 = vshrl.u32 %v464, 5
    %v466 = vand.u32 %v464, 31
    %v467 = vsub.s32 32, %v466
    %v468 = vshrl.u32 683565275, %v467
    %v469 = vshll.u32 683565275, %v466
    %v470 = vshrl.u32 2475754826, %v467
    %v471 = vor.u32 %v469, %v470
    %v472 = vshll.u32 2475754826, %v466
    %v473 = vshrl.u32 2131351028, %v467
    %v474 = vor.u32 %v472, %v473
    %v475 = vshll.u32 2131351028, %v466
    %v476 = vshrl.u32 2102212464, %v467
    %v477 = vor.u32 %v475, %v476
    %v478 = vshll.u32 2102212464, %v466
    %v479 = vshrl.u32 920167782, %v467
    %v480 = vor.u32 %v478, %v479
    %v481 = vshll.u32 920167782, %v466
    %v482 = vshrl.u32 1326507024, %v467
    %v483 = vor.u32 %v481, %v482
    %vm484 = vcmp.lt.s32.totalorder %v465, 1
    %vm485 = vcmp.lt.s32.totalorder %v465, 2
    %vm486 = vcmp.lt.s32.totalorder %v465, 3
    %vm487 = vcmp.lt.s32.totalorder %v465, 4
    %v488 = vsel %vm484, %v468, %v471
    %v489 = vsel %vm487, %v477, 2102212464
    %v490 = vsel %vm486, %v474, %v489
    %v491 = vsel %vm485, %v488, %v490
    %v492 = vsel %vm484, %v471, %v474
    %v493 = vsel %vm487, %v480, 920167782
    %v494 = vsel %vm486, %v477, %v493
    %v495 = vsel %vm485, %v492, %v494
    %v496 = vsel %vm484, %v474, %v477
    %v497 = vsel %vm487, %v483, 1326507024
    %v498 = vsel %vm486, %v480, %v497
    %v499 = vsel %vm485, %v496, %v498
    %v500 = vshll.u32 %v460, 8
    %v501 = vand.u32 %v500, 65535
    %v502 = vshrl.u32 %v500, 16
    %v503 = vand.u32 %v499, 65535
    %v504 = vshrl.u32 %v499, 16
    %v505 = vmul.u32 %v501, %v503
    %v506 = vmul.u32 %v501, %v504
    %v507 = vmul.u32 %v502, %v503
    %v508 = vmul.u32 %v502, %v504
    %v509 = vshll.u32 %v506, 16
    %v510 = vshrl.u32 %v506, 16
    %v511 = vshll.u32 %v507, 16
    %v512 = vshrl.u32 %v507, 16
    %vm513 = vc.u32 %v505, %v509
    %v514 = vsel %vm513, 1, 0
    %v515 = vadd.s32 %v505, %v509
    %v516 = vadd.s32 %v508, %v514
    %vm517 = vc.u32 %v515, %v511
    %v518 = vsel %vm517, 1, 0
    %v519 = vadd.s32 %v515, %v511
    %v520 = vadd.s32 %v516, %v518
    %v521 = vadd.s32 %v520, %v510
    %v522 = vadd.s32 %v521, %v512
    %v523 = vand.u32 %v500, 65535
    %v524 = vshrl.u32 %v500, 16
    %v525 = vand.u32 %v495, 65535
    %v526 = vshrl.u32 %v495, 16
    %v527 = vmul.u32 %v523, %v525
    %v528 = vmul.u32 %v523, %v526
    %v529 = vmul.u32 %v524, %v525
    %v530 = vmul.u32 %v524, %v526
    %v531 = vshll.u32 %v528, 16
    %v532 = vshrl.u32 %v528, 16
    %v533 = vshll.u32 %v529, 16
    %v534 = vshrl.u32 %v529, 16
    %vm535 = vc.u32 %v527, %v531
    %v536 = vsel %vm535, 1, 0
    %v537 = vadd.s32 %v527, %v531
    %v538 = vadd.s32 %v530, %v536
    %vm539 = vc.u32 %v537, %v533
    %v540 = vsel %vm539, 1, 0
    %v541 = vadd.s32 %v537, %v533
    %v542 = vadd.s32 %v538, %v540
    %v543 = vadd.s32 %v542, %v532
    %v544 = vadd.s32 %v543, %v534
    %v545 = vmul.u32 %v500, %v491
    %v546 = vadd.s32 %v522, %v541
    %vm547 = vc.u32 %v522, %v541
    %v548 = vadd.s32 %v544, 1
    %v549 = vsel %vm547, %v548, %v544
    %v550 = vadd.s32 %v545, %v549
    %v551 = vadd.s32 %v550, 536870912
    %v552 = vshrl.u32 %v551, 30
    %v553 = vshll.u32 %v552, 30
    %v554 = vsub.s32 %v550, %v553
    %vm555 = vcmp.lt.s32.totalorder %v554, 0
    %v556 = vsub.s32 0, %v554
    %v557 = vsel %vm555, %v556, %v554
    %v558 = vclz %v557
    %v559 = vsub.s32 %v558, 2
    %vm560 = vcmp.gt.s32.totalorder 0, %v559
    %v561 = vsel %vm560, 0, %v559
    %v562 = vsub.s32 32, %v561
    %v563 = vshll.u32 %v554, %v561
    %v564 = vshrl.u32 %v546, %v562
    %v565 = vor.u32 %v563, %v564
    %v566 = vsub.s32 4294967266, %v561
    %v567 = vadd.s32 %v566, 127
    %v568 = vshll.u32 %v567, 23
    %v569 = vor.u32 4788187, %v568
    %v570 = vand.u32 2147483647, %v569
    %v572 = vcvt.s32.f32 %v565
    %v573 = vmul.f32 %v572, %v570
    %v574 = vxor.u32 %v573, 2147483648
    %v575 = vsel %vm454, %v574, %v573
    %v576 = vsub.s32 4, %v552
    %v577 = vsel %vm454, %v576, %v552
    %v578 = vsel %vm453, %v296, %v575
    %v579 = vsel %vm453, 0, %v577
    %v580 = vmul.f32 %v578, %v578
    %v581 = vmul.f32 %v580, -0.001358992
    %v582 = vadd.f32 %v581, 0.041655596
    %v583 = vmul.f32 %v580, %v582
    %v584 = vadd.f32 %v583, -0.4999988
    %v585 = vmul.f32 %v580, %v584
    %v586 = vadd.f32 1.0, %v585
    %v587 = vmul.f32 %v578, %v578
    %v588 = vmul.f32 %v587, -0.00019511016
    %v589 = vadd.f32 %v588, 0.008332121
    %v590 = vmul.f32 %v587, %v589
    %v591 = vadd.f32 %v590, -0.16666654
    %v592 = vmul.f32 %v587, %v591
    %v593 = vadd.f32 %v592, 1.0
    %v594 = vmul.f32 %v593, %v578
    %vm595 = vweird.f32 %v296
    %v596 = vand.u32 %v579, 3
    %vm597 = vcmp.lt.s32.totalorder %v596, 2
    %vm598 = vcmp.eq.s32.totalorder %v596, 0
    %v599 = vxor.u32 %v594, 2147483648
    %v600 = vsel %vm598, %v586, %v599
    %vm601 = vcmp.eq.s32.totalorder %v596, 2
    %v602 = vxor.u32 %v586, 2147483648
    %v603 = vsel %vm601, %v602, %v594
    %v604 = vsel %vm597, %v600, %v603
    %v605 = vsel %vm595, nan, %v604
    %v606 = vand.u32 2147483647, %v293
    %vm607 = vcmp.le.f32.partialorder %v606, 0.7853982
    %vm608 = vcmp.lt.s32.totalorder %v293, 0
    %v609 = vand.u32 %v293, 2139095040
    %v610 = vshrl.u32 %v609, 23
    %v611 = vsub.s32 %v610, 127
    %v612 = vand.u32 2147483647, %v293
    %v613 = vand.u32 %v612, 8388607
    %v614 = vor.u32 %v613, 8388608
    %v615 = vsub.s32 0, %v614
    %v616 = vadd.s32 %v611, 1
    %vm617 = vcmp.gt.s32.totalorder %v616, 0
    %v618 = vsel %vm617, %v616, 0
    %v619 = vshrl.u32 %v618, 5
    %v620 = vand.u32 %v618, 31
    %v621 = vsub.s32 32, %v620
    %v622 = vshrl.u32 683565275, %v621
    %v623 = vshll.u32 683565275, %v620
    %v624 = vshrl.u32 2475754826, %v621
    %v625 = vor.u32 %v623, %v624
    %v626 = vshll.u32 2475754826, %v620
    %v627 = vshrl.u32 2131351028, %v621
    %v628 = vor.u32 %v626, %v627
    %v629 = vshll.u32 2131351028, %v620
    %v630 = vshrl.u32 2102212464, %v621
    %v631 = vor.u32 %v629, %v630
    %v632 = vshll.u32 2102212464, %v620
    %v633 = vshrl.u32 920167782, %v621
    %v634 = vor.u32 %v632, %v633
    %v635 = vshll.u32 920167782, %v620
    %v636 = vshrl.u32 1326507024, %v621
    %v637 = vor.u32 %v635, %v636
    %vm638 = vcmp.lt.s32.totalorder %v619, 1
    %vm639 = vcmp.lt.s32.totalorder %v619, 2
    %vm640 = vcmp.lt.s32.totalorder %v619, 3
    %vm641 = vcmp.lt.s32.totalorder %v619, 4
    %v642 = vsel %vm638, %v622, %v625
    %v643 = vsel %vm641, %v631, 2102212464
    %v644 = vsel %vm640, %v628, %v643
    %v645 = vsel %vm639, %v642, %v644
    %v646 = vsel %vm638, %v625, %v628
    %v647 = vsel %vm641, %v634, 920167782
    %v648 = vsel %vm640, %v631, %v647
    %v649 = vsel %vm639, %v646, %v648
    %v650 = vsel %vm638, %v628, %v631
    %v651 = vsel %vm641, %v637, 1326507024
    %v652 = vsel %vm640, %v634, %v651
    %v653 = vsel %vm639, %v650, %v652
    %v654 = vshll.u32 %v614, 8
    %v655 = vand.u32 %v654, 65535
    %v656 = vshrl.u32 %v654, 16
    %v657 = vand.u32 %v653, 65535
    %v658 = vshrl.u32 %v653, 16
    %v659 = vmul.u32 %v655, %v657
    %v660 = vmul.u32 %v655, %v658
    %v661 = vmul.u32 %v656, %v657
    %v662 = vmul.u32 %v656, %v658
    %v663 = vshll.u32 %v660, 16
    %v664 = vshrl.u32 %v660, 16
    %v665 = vshll.u32 %v661, 16
    %v666 = vshrl.u32 %v661, 16
    %vm667 = vc.u32 %v659, %v663
    %v668 = vsel %vm667, 1, 0
    %v669 = vadd.s32 %v659, %v663
    %v670 = vadd.s32 %v662, %v668
    %vm671 = vc.u32 %v669, %v665
    %v672 = vsel %vm671, 1, 0
    %v673 = vadd.s32 %v669, %v665
    %v674 = vadd.s32 %v670, %v672
    %v675 = vadd.s32 %v674, %v664
    %v676 = vadd.s32 %v675, %v666
    %v677 = vand.u32 %v654, 65535
    %v678 = vshrl.u32 %v654, 16
    %v679 = vand.u32 %v649, 65535
    %v680 = vshrl.u32 %v649, 16
    %v681 = vmul.u32 %v677, %v679
    %v682 = vmul.u32 %v677, %v680
    %v683 = vmul.u32 %v678, %v679
    %v684 = vmul.u32 %v678, %v680
    %v685 = vshll.u32 %v682, 16
    %v686 = vshrl.u32 %v682, 16
    %v687 = vshll.u32 %v683, 16
    %v688 = vshrl.u32 %v683, 16
    %vm689 = vc.u32 %v681, %v685
    %v690 = vsel %vm689, 1, 0
    %v691 = vadd.s32 %v681, %v685
    %v692 = vadd.s32 %v684, %v690
    %vm693 = vc.u32 %v691, %v687
    %v694 = vsel %vm693, 1, 0
    %v695 = vadd.s32 %v691, %v687
    %v696 = vadd.s32 %v692, %v694
    %v697 = vadd.s32 %v696, %v686
    %v698 = vadd.s32 %v697, %v688
    %v699 = vmul.u32 %v654, %v645
    %v700 = vadd.s32 %v676, %v695
    %vm701 = vc.u32 %v676, %v695
    %v702 = vadd.s32 %v698, 1
    %v703 = vsel %vm701, %v702, %v698
    %v704 = vadd.s32 %v699, %v703
    %v705 = vadd.s32 %v704, 536870912
    %v706 = vshrl.u32 %v705, 30
    %v707 = vshll.u32 %v706, 30
    %v708 = vsub.s32 %v704, %v707
    %vm709 = vcmp.lt.s32.totalorder %v708, 0
    %v710 = vsub.s32 0, %v708
    %v711 = vsel %vm709, %v710, %v708
    %v712 = vclz %v711
    %v713 = vsub.s32 %v712, 2
    %vm714 = vcmp.gt.s32.totalorder 0, %v713
    %v715 = vsel %vm714, 0, %v713
    %v716 = vsub.s32 32, %v715
    %v717 = vshll.u32 %v708, %v715
    %v718 = vshrl.u32 %v700, %v716
    %v719 = vor.u32 %v717, %v718
    %v720 = vsub.s32 4294967266, %v715
    %v721 = vadd.s32 %v720, 127
    %v722 = vshll.u32 %v721, 23
    %v723 = vor.u32 4788187, %v722
    %v724 = vand.u32 2147483647, %v723
    %v726 = vcvt.s32.f32 %v719
    %v727 = vmul.f32 %v726, %v724
    %v728 = vxor.u32 %v727, 2147483648
    %v729 = vsel %vm608, %v728, %v727
    %v730 = vsub.s32 4, %v706
    %v731 = vsel %vm608, %v730, %v706
    %v732 = vsel %vm607, %v293, %v729
    %v733 = vsel %vm607, 0, %v731
    %v734 = vmul.f32 %v732, %v732
    %v735 = vmul.f32 %v734, -0.001358992
    %v736 = vadd.f32 %v735, 0.041655596
    %v737 = vmul.f32 %v734, %v736
    %v738 = vadd.f32 %v737, -0.4999988
    %v739 = vmul.f32 %v734, %v738
    %v740 = vadd.f32 1.0, %v739
    %v741 = vmul.f32 %v732, %v732
    %v742 = vmul.f32 %v741, -0.00019511016
    %v743 = vadd.f32 %v742, 0.008332121
    %v744 = vmul.f32 %v741, %v743
    %v745 = vadd.f32 %v744, -0.16666654
    %v746 = vmul.f32 %v741, %v745
    %v747 = vadd.f32 %v746, 1.0
    %v748 = vmul.f32 %v747, %v732
    %vm749 = vweird.f32 %v293
    %v750 = vadd.s32 %v733, 3
    %v751 = vand.u32 %v750, 3
    %vm752 = vcmp.lt.s32.totalorder %v751, 2
    %vm753 = vcmp.eq.s32.totalorder %v751, 0
    %v754 = vxor.u32 %v748, 2147483648
    %v755 = vsel %vm753, %v740, %v754
    %vm756 = vcmp.eq.s32.totalorder %v751, 2
    %v757 = vxor.u32 %v740, 2147483648
    %v758 = vsel %vm756, %v757, %v748
    %v759 = vsel %vm752, %v755, %v758
    %v760 = vsel %vm749, nan, %v759
    %v761 = vand.u32 2147483647, %v296
    %vm762 = vcmp.le.f32.partialorder %v761, 0.7853982
    %vm763 = vcmp.lt.s32.totalorder %v296, 0
    %v764 = vand.u32 %v296, 2139095040
    %v765 = vshrl.u32 %v764, 23
    %v766 = vsub.s32 %v765, 127
    %v767 = vand.u32 2147483647, %v296
    %v768 = vand.u32 %v767, 8388607
    %v769 = vor.u32 %v768, 8388608
    %v770 = vsub.s32 0, %v769
    %v771 = vadd.s32 %v766, 1
    %vm772 = vcmp.gt.s32.totalorder %v771, 0
    %v773 = vsel %vm772, %v771, 0
    %v774 = vshrl.u32 %v773, 5
    %v775 = vand.u32 %v773, 31
    %v776 = vsub.s32 32, %v775
    %v777 = vshrl.u32 683565275, %v776
    %v778 = vshll.u32 683565275, %v775
    %v779 = vshrl.u32 2475754826, %v776
    %v780 = vor.u32 %v778, %v779
    %v781 = vshll.u32 2475754826, %v775
    %v782 = vshrl.u32 2131351028, %v776
    %v783 = vor.u32 %v781, %v782
    %v784 = vshll.u32 2131351028, %v775
    %v785 = vshrl.u32 2102212464, %v776
    %v786 = vor.u32 %v784, %v785
    %v787 = vshll.u32 2102212464, %v775
    %v788 = vshrl.u32 920167782, %v776
    %v789 = vor.u32 %v787, %v788
    %v790 = vshll.u32 920167782, %v775
    %v791 = vshrl.u32 1326507024, %v776
    %v792 = vor.u32 %v790, %v791
    %vm793 = vcmp.lt.s32.totalorder %v774, 1
    %vm794 = vcmp.lt.s32.totalorder %v774, 2
    %vm795 = vcmp.lt.s32.totalorder %v774, 3
    %vm796 = vcmp.lt.s32.totalorder %v774, 4
    %v797 = vsel %vm793, %v777, %v780
    %v798 = vsel %vm796, %v786, 2102212464
    %v799 = vsel %vm795, %v783, %v798
    %v800 = vsel %vm794, %v797, %v799
    %v801 = vsel %vm793, %v780, %v783
    %v802 = vsel %vm796, %v789, 920167782
    %v803 = vsel %vm795, %v786, %v802
    %v804 = vsel %vm794, %v801, %v803
    %v805 = vsel %vm793, %v783, %v786
    %v806 = vsel %vm796, %v792, 1326507024
    %v807 = vsel %vm795, %v789, %v806
    %v808 = vsel %vm794, %v805, %v807
    %v809 = vshll.u32 %v769, 8
    %v810 = vand.u32 %v809, 65535
    %v811 = vshrl.u32 %v809, 16
    %v812 = vand.u32 %v808, 65535
    %v813 = vshrl.u32 %v808, 16
    %v814 = vmul.u32 %v810, %v812
    %v815 = vmul.u32 %v810, %v813
    %v816 = vmul.u32 %v811, %v812
    %v817 = vmul.u32 %v811, %v813
    %v818 = vshll.u32 %v815, 16
    %v819 = vshrl.u32 %v815, 16
    %v820 = vshll.u32 %v816, 16
    %v821 = vshrl.u32 %v816, 16
    %vm822 = vc.u32 %v814, %v818
    %v823 = vsel %vm822, 1, 0
    %v824 = vadd.s32 %v814, %v818
    %v825 = vadd.s32 %v817, %v823
    %vm826 = vc.u32 %v824, %v820
    %v827 = vsel %vm826, 1, 0
    %v828 = vadd.s32 %v824, %v820
    %v829 = vadd.s32 %v825, %v827
    %v830 = vadd.s32 %v829, %v819
    %v831 = vadd.s32 %v830, %v821
    %v832 = vand.u32 %v809, 65535
    %v833 = vshrl.u32 %v809, 16
    %v834 = vand.u32 %v804, 65535
    %v835 = vshrl.u32 %v804, 16
    %v836 = vmul.u32 %v832, %v834
    %v837 = vmul.u32 %v832, %v835
    %v838 = vmul.u32 %v833, %v834
    %v839 = vmul.u32 %v833, %v835
    %v840 = vshll.u32 %v837, 16
    %v841 = vshrl.u32 %v837, 16
    %v842 = vshll.u32 %v838, 16
    %v843 = vshrl.u32 %v838, 16
    %vm844 = vc.u32 %v836, %v840
    %v845 = vsel %vm844, 1, 0
    %v846 = vadd.s32 %v836, %v840
    %v847 = vadd.s32 %v839, %v845
    %vm848 = vc.u32 %v846, %v842
    %v849 = vsel %vm848, 1, 0
    %v850 = vadd.s32 %v846, %v842
    %v851 = vadd.s32 %v847, %v849
    %v852 = vadd.s32 %v851, %v841
    %v853 = vadd.s32 %v852, %v843
    %v854 = vmul.u32 %v809, %v800
    %v855 = vadd.s32 %v831, %v850
    %vm856 = vc.u32 %v831, %v850
    %v857 = vadd.s32 %v853, 1
    %v858 = vsel %vm856, %v857, %v853
    %v859 = vadd.s32 %v854, %v858
    %v860 = vadd.s32 %v859, 536870912
    %v861 = vshrl.u32 %v860, 30
    %v862 = vshll.u32 %v861, 30
    %v863 = vsub.s32 %v859, %v862
    %vm864 = vcmp.lt.s32.totalorder %v863, 0
    %v865 = vsub.s32 0, %v863
    %v866 = vsel %vm864, %v865, %v863
    %v867 = vclz %v866
    %v868 = vsub.s32 %v867, 2
    %vm869 = vcmp.gt.s32.totalorder 0, %v868
    %v870 = vsel %vm869, 0, %v868
    %v871 = vsub.s32 32, %v870
    %v872 = vshll.u32 %v863, %v870
    %v873 = vshrl.u32 %v855, %v871
    %v874 = vor.u32 %v872, %v873
    %v875 = vsub.s32 4294967266, %v870
    %v876 = vadd.s32 %v875, 127
    %v877 = vshll.u32 %v876, 23
    %v878 = vor.u32 4788187, %v877
    %v879 = vand.u32 2147483647, %v878
    %v881 = vcvt.s32.f32 %v874
    %v882 = vmul.f32 %v881, %v879
    %v883 = vxor.u32 %v882, 2147483648
    %v884 = vsel %vm763, %v883, %v882
    %v885 = vsub.s32 4, %v861
    %v886 = vsel %vm763, %v885, %v861
    %v887 = vsel %vm762, %v296, %v884
    %v888 = vsel %vm762, 0, %v886
    %v889 = vmul.f32 %v887, %v887
    %v890 = vmul.f32 %v889, -0.001358992
    %v891 = vadd.f32 %v890, 0.041655596
    %v892 = vmul.f32 %v889, %v891
    %v893 = vadd.f32 %v892, -0.4999988
    %v894 = vmul.f32 %v889, %v893
    %v895 = vadd.f32 1.0, %v894
    %v896 = vmul.f32 %v887, %v887
    %v897 = vmul.f32 %v896, -0.00019511016
    %v898 = vadd.f32 %v897, 0.008332121
    %v899 = vmul.f32 %v896, %v898
    %v900 = vadd.f32 %v899, -0.16666654
    %v901 = vmul.f32 %v896, %v900
    %v902 = vadd.f32 %v901, 1.0
    %v903 = vmul.f32 %v902, %v887
    %vm904 = vweird.f32 %v296
    %v905 = vadd.s32 %v888, 3
    %v906 = vand.u32 %v905, 3
    %vm907 = vcmp.lt.s32.totalorder %v906, 2
    %vm908 = vcmp.eq.s32.totalorder %v906, 0
    %v909 = vxor.u32 %v903, 2147483648
    %v910 = vsel %vm908, %v895, %v909
    %vm911 = vcmp.eq.s32.totalorder %v906, 2
    %v912 = vxor.u32 %v895, 2147483648
    %v913 = vsel %vm911, %v912, %v903
    %v914 = vsel %vm907, %v910, %v913
    %v915 = vsel %vm904, nan, %v914
    %v916 = vld [vmem:[#allocation10] sm:$0xf]
    %v917 = vld [vmem:[#allocation10 + $0x4] sm:$0xf]
    %v918 = vld [vmem:[#allocation10 + $0x8] sm:$0xf]
    %v919 = vld [vmem:[#allocation10 + $0xc] sm:$0xf]
    %v920 = vpack.c.bf16 %v178, %v176
    %v925 = vunpack.c.l.b16 %v916
    %v926 = vunpack.c.l.b16 %v917
    %v927 = vunpack.c.l.b16 %v918
    %v928 = vunpack.c.l.b16 %v919
    %v929 = vpack.c.b16 %v926, %v925
    %v930 = vpack.c.b16 %v928, %v927
    %v934 = vsel %vm162, %v920, 0
    %936 = vmatpush.bf16.msra.mxu0 0
    %937 = vmatpush.bf16.msra.mxu0 0
    %938 = vmatpush.bf16.msra.mxu0 0
    %939 = vmatpush.bf16.msra.mxu0 0
    %940 = vmatpush.bf16.msra.mxu0 0
    %941 = vmatpush.bf16.msra.mxu0 0
    %942 = vmatpush.bf16.msra.mxu0 %v930
    %943 = vmatpush.bf16.msra.mxu0 %v929
    %944 = vmatmul.bf16.gmra.mxu0 %v934
    %v945 = vpop.f32.mrf.mxu0
    %v946 = vadd.f32 0.0, %v945
    %v947 = vpop.f32.mrf.mxu0
    %v948 = vadd.f32 0.0, %v947
    %949 = vdwg.mxu0
    %v950 = vpack.c.bf16 %v220, %v218
    %v952 = vsel %vm162, %v950, 0
    %954 = vmatpush.bf16.msra.mxu0 0
    %955 = vmatpush.bf16.msra.mxu0 0
    %956 = vmatpush.bf16.msra.mxu0 0
    %957 = vmatpush.bf16.msra.mxu0 0
    %958 = vmatpush.bf16.msra.mxu0 0
    %959 = vmatpush.bf16.msra.mxu0 0
    %960 = vmatpush.bf16.msra.mxu0 %v930
    %961 = vmatpush.bf16.msra.mxu0 %v929
    %962 = vmatmul.bf16.gmra.mxu0 %v952
    %v963 = vpop.f32.mrf.mxu0
    %v964 = vadd.f32 0.0, %v963
    %v965 = vpop.f32.mrf.mxu0
    %v966 = vadd.f32 0.0, %v965
    %967 = vdwg.mxu0
    %v968 = vmul.f32 %v176, %v451
    %v969 = vmul.f32 %v178, %v605
    %v970 = vmul.f32 %v946, %v760
    %v971 = vmul.f32 %v948, %v915
    %v972 = vadd.f32 %v968, %v970
    %v973 = vadd.f32 %v969, %v971
    %v974 = vmul.f32 %v218, %v451
    %v975 = vmul.f32 %v220, %v605
    %v976 = vmul.f32 %v964, %v760
    %v977 = vmul.f32 %v966, %v915
    %v978 = vadd.f32 %v974, %v976
    %v979 = vadd.f32 %v975, %v977
    %v980 = vmul.f32 %v972, 0.35355338
    %v981 = vmul.f32 %v973, 0.35355338
    %v982 = vpack.c.bf16 %v980, %v980
    %v983 = vpack.c.bf16 %v981, %v981
    %v984 = vpack.c.bf16 %v978, %v978
    %v985 = vpack.c.bf16 %v979, %v979
    %v986 = vpack.c.bf16 %v260, %v260
    %v987 = vpack.c.bf16 %v262, %v262
    %v990 = vunpack.c.l.b16 %v982
    %v991 = vunpack.c.l.b16 %v983
    %v992 = vpack.c.b16 %v991, %v990
    %v995 = vunpack.c.l.b16 %v984
    %v996 = vunpack.c.l.b16 %v985
    %v997 = vpack.c.b16 %v996, %v995
    %vm998 = vcmask 64512
    %v1000 = vsel %vm998, %v992, 0
    %v1003 = vsel %vm998, %v997, 0
    %1005 = vmatpush.bf16.xpose.msra.mxu0 0
    %1006 = vmatpush.bf16.xpose.msra.mxu0 0
    %1007 = vmatpush.bf16.xpose.msra.mxu0 0
    %1008 = vmatpush.bf16.xpose.msra.mxu0 0
    %1009 = vmatpush.bf16.xpose.msra.mxu0 0
    %1010 = vmatpush.bf16.xpose.msra.mxu0 0
    %1011 = vmatpush.bf16.xpose.msra.mxu0 0
    %1012 = vmatpush.bf16.xpose.msra.mxu0 %v1003
    %1013 = vmatmul.bf16.gmra.mxu0 %v1000
    %v1014 = vpop.f32.mrf.mxu0
    %v1015 = vadd.f32 0.0, %v1014
    %v1016 = vpop.f32.mrf.mxu0
    %v1017 = vadd.f32 0.0, %v1016
    %1018 = vdwg.mxu0
    %v1019 = vsel %vm268, %v1015, -inf
    %1020 = vmax.xlane.f32.xlu0 %v1019
    %v1021 = vpop.xlane.xlu0 %1020
    %v1022 = vsel %vm268, %v1017, -inf
    %1023 = vmax.xlane.f32.xlu0 %v1022
    %v1024 = vpop.xlane.xlu0 %1023
    %v1025 = vsub.f32 %v1015, %v1021
    %v1026 = vsub.f32 %v1017, %v1024
    %v1027 = vmul.f32 %v1025, 1.442695
    %v1028 = vpow.pop %v1027
    %v1029 = vmul.f32 %v1026, 1.442695
    %v1030 = vpow.pop %v1029
    %v1031 = vsel %vm268, %v1028, 0.0
    %1032 = vadd.xlane.f32.xlu0 %v1031
    %v1033 = vpop.xlane.xlu0 %1032
    %v1034 = vsel %vm268, %v1030, 0.0
    %1035 = vadd.xlane.f32.xlu0 %v1034
    %v1036 = vpop.xlane.xlu0 %1035
    %v1037 = vrcp.pop %v1033
    %v1038 = vrcp.pop %v1036
    %v1039 = vmul.f32 %v1028, %v1037
    %v1040 = vmul.f32 %v1030, %v1038
    %v1041 = vpack.c.bf16 %v1040, %v1039
    %v1044 = vunpack.c.l.b16 %v986
    %v1045 = vunpack.c.l.b16 %v987
    %v1046 = vpack.c.b16 %v1045, %v1044
    %v1049 = vsel %vm268, %v1041, 0
    %1051 = vmatpush.bf16.msra.mxu0 0
    %1052 = vmatpush.bf16.msra.mxu0 0
    %1053 = vmatpush.bf16.msra.mxu0 0
    %1054 = vmatpush.bf16.msra.mxu0 0
    %1055 = vmatpush.bf16.msra.mxu0 0
    %1056 = vmatpush.bf16.msra.mxu0 0
    %1057 = vmatpush.bf16.msra.mxu0 0
    %1058 = vmatpush.bf16.msra.mxu0 %v1046
    %1059 = vmatmul.bf16.gmra.mxu0 %v1049
    %v1060 = vpop.f32.mrf.mxu0
    %v1061 = vadd.f32 0.0, %v1060
    %v1062 = vpop.f32.mrf.mxu0
    %v1063 = vadd.f32 0.0, %v1062
    %1064 = vdwg.mxu0
    %1065 = vrot.lane.b32.xlu0 %v992, 120
    %v1066 = vpop.permute.xlu0 %1065
    %1067 = vrot.lane.b32.xlu0 %v997, 120
    %v1068 = vpop.permute.xlu0 %1067
    %v1070 = vsel %vm998, %v1066, 0
    %v1073 = vsel %vm998, %v1068, 0
    %1075 = vmatpush.bf16.xpose.msra.mxu0 0
    %1076 = vmatpush.bf16.xpose.msra.mxu0 0
    %1077 = vmatpush.bf16.xpose.msra.mxu0 0
    %1078 = vmatpush.bf16.xpose.msra.mxu0 0
    %1079 = vmatpush.bf16.xpose.msra.mxu0 0
    %1080 = vmatpush.bf16.xpose.msra.mxu0 0
    %1081 = vmatpush.bf16.xpose.msra.mxu0 0
    %1082 = vmatpush.bf16.xpose.msra.mxu0 %v1073
    %1083 = vmatmul.bf16.gmra.mxu0 %v1070
    %v1084 = vpop.f32.mrf.mxu0
    %v1085 = vadd.f32 0.0, %v1084
    %v1086 = vpop.f32.mrf.mxu0
    %v1087 = vadd.f32 0.0, %v1086
    %1088 = vdwg.mxu0
    %v1089 = vsel %vm268, %v1085, -inf
    %1090 = vmax.xlane.f32.xlu0 %v1089
    %v1091 = vpop.xlane.xlu0 %1090
    %v1092 = vsel %vm268, %v1087, -inf
    %1093 = vmax.xlane.f32.xlu0 %v1092
    %v1094 = vpop.xlane.xlu0 %1093
    %v1095 = vsub.f32 %v1085, %v1091
    %v1096 = vsub.f32 %v1087, %v1094
    %v1097 = vmul.f32 %v1095, 1.442695
    %v1098 = vpow.pop %v1097
    %v1099 = vmul.f32 %v1096, 1.442695
    %v1100 = vpow.pop %v1099
    %v1101 = vsel %vm268, %v1098, 0.0
    %1102 = vadd.xlane.f32.xlu0 %v1101
    %v1103 = vpop.xlane.xlu0 %1102
    %v1104 = vsel %vm268, %v1100, 0.0
    %1105 = vadd.xlane.f32.xlu0 %v1104
    %v1106 = vpop.xlane.xlu0 %1105
    %v1107 = vrcp.pop %v1103
    %v1108 = vrcp.pop %v1106
    %v1109 = vmul.f32 %v1098, %v1107
    %v1110 = vmul.f32 %v1100, %v1108
    %v1111 = vpack.c.bf16 %v1110, %v1109
    %1112 = vrot.lane.b32.xlu0 %v1046, 120
    %v1113 = vpop.permute.xlu0 %1112
    %v1116 = vsel %vm268, %v1111, 0
    %1118 = vmatpush.bf16.msra.mxu0 0
    %1119 = vmatpush.bf16.msra.mxu0 0
    %1120 = vmatpush.bf16.msra.mxu0 0
    %1121 = vmatpush.bf16.msra.mxu0 0
    %1122 = vmatpush.bf16.msra.mxu0 0
    %1123 = vmatpush.bf16.msra.mxu0 0
    %1124 = vmatpush.bf16.msra.mxu0 0
    %1125 = vmatpush.bf16.msra.mxu0 %v1113
    %1126 = vmatmul.bf16.gmra.mxu0 %v1116
    %v1127 = vpop.f32.mrf.mxu0
    %v1128 = vadd.f32 0.0, %v1127
    %v1129 = vpop.f32.mrf.mxu0
    %v1130 = vadd.f32 0.0, %v1129
    %1131 = vdwg.mxu0
    %1132 = vrot.lane.b32.xlu0 %v992, 112
    %v1133 = vpop.permute.xlu0 %1132
    %1134 = vrot.lane.b32.xlu0 %v997, 112
    %v1135 = vpop.permute.xlu0 %1134
    %v1137 = vsel %vm998, %v1133, 0
    %v1140 = vsel %vm998, %v1135, 0
    %1142 = vmatpush.bf16.xpose.msra.mxu0 0
    %1143 = vmatpush.bf16.xpose.msra.mxu0 0
    %1144 = vmatpush.bf16.xpose.msra.mxu0 0
    %1145 = vmatpush.bf16.xpose.msra.mxu0 0
    %1146 = vmatpush.bf16.xpose.msra.mxu0 0
    %1147 = vmatpush.bf16.xpose.msra.mxu0 0
    %1148 = vmatpush.bf16.xpose.msra.mxu0 0
    %1149 = vmatpush.bf16.xpose.msra.mxu0 %v1140
    %1150 = vmatmul.bf16.gmra.mxu0 %v1137
    %v1151 = vpop.f32.mrf.mxu0
    %v1152 = vadd.f32 0.0, %v1151
    %v1153 = vpop.f32.mrf.mxu0
    %v1154 = vadd.f32 0.0, %v1153
    %1155 = vdwg.mxu0
    %v1156 = vsel %vm268, %v1152, -inf
    %1157 = vmax.xlane.f32.xlu0 %v1156
    %v1158 = vpop.xlane.xlu0 %1157
    %v1159 = vsel %vm268, %v1154, -inf
    %1160 = vmax.xlane.f32.xlu0 %v1159
    %v1161 = vpop.xlane.xlu0 %1160
    %v1162 = vsub.f32 %v1152, %v1158
    %v1163 = vsub.f32 %v1154, %v1161
    %v1164 = vmul.f32 %v1162, 1.442695
    %v1165 = vpow.pop %v1164
    %v1166 = vmul.f32 %v1163, 1.442695
    %v1167 = vpow.pop %v1166
    %v1168 = vsel %vm268, %v1165, 0.0
    %1169 = vadd.xlane.f32.xlu0 %v1168
    %v1170 = vpop.xlane.xlu0 %1169
    %v1171 = vsel %vm268, %v1167, 0.0
    %1172 = vadd.xlane.f32.xlu0 %v1171
    %v1173 = vpop.xlane.xlu0 %1172
    %v1174 = vrcp.pop %v1170
    %v1175 = vrcp.pop %v1173
    %v1176 = vmul.f32 %v1165, %v1174
    %v1177 = vmul.f32 %v1167, %v1175
    %v1178 = vpack.c.bf16 %v1177, %v1176
    %1179 = vrot.lane.b32.xlu0 %v1046, 112
    %v1180 = vpop.permute.xlu0 %1179
    %v1183 = vsel %vm268, %v1178, 0
    %1185 = vmatpush.bf16.msra.mxu0 0
    %1186 = vmatpush.bf16.msra.mxu0 0
    %1187 = vmatpush.bf16.msra.mxu0 0
    %1188 = vmatpush.bf16.msra.mxu0 0
    %1189 = vmatpush.bf16.msra.mxu0 0
    %1190 = vmatpush.bf16.msra.mxu0 0
    %1191 = vmatpush.bf16.msra.mxu0 0
    %1192 = vmatpush.bf16.msra.mxu0 %v1180
    %1193 = vmatmul.bf16.gmra.mxu0 %v1183
    %v1194 = vpop.f32.mrf.mxu0
    %v1195 = vadd.f32 0.0, %v1194
    %v1196 = vpop.f32.mrf.mxu0
    %v1197 = vadd.f32 0.0, %v1196
    %1198 = vdwg.mxu0
    %1199 = vrot.lane.b32.xlu0 %v992, 104
    %v1200 = vpop.permute.xlu0 %1199
    %1201 = vrot.lane.b32.xlu0 %v997, 104
    %v1202 = vpop.permute.xlu0 %1201
    %v1204 = vsel %vm998, %v1200, 0
    %v1207 = vsel %vm998, %v1202, 0
    %1209 = vmatpush.bf16.xpose.msra.mxu0 0
    %1210 = vmatpush.bf16.xpose.msra.mxu0 0
    %1211 = vmatpush.bf16.xpose.msra.mxu0 0
    %1212 = vmatpush.bf16.xpose.msra.mxu0 0
    %1213 = vmatpush.bf16.xpose.msra.mxu0 0
    %1214 = vmatpush.bf16.xpose.msra.mxu0 0
    %1215 = vmatpush.bf16.xpose.msra.mxu0 0
    %1216 = vmatpush.bf16.xpose.msra.mxu0 %v1207
    %1217 = vmatmul.bf16.gmra.mxu0 %v1204
    %v1218 = vpop.f32.mrf.mxu0
    %v1219 = vadd.f32 0.0, %v1218
    %v1220 = vpop.f32.mrf.mxu0
    %v1221 = vadd.f32 0.0, %v1220
    %1222 = vdwg.mxu0
    %v1223 = vsel %vm268, %v1219, -inf
    %1224 = vmax.xlane.f32.xlu0 %v1223
    %v1225 = vpop.xlane.xlu0 %1224
    %v1226 = vsel %vm268, %v1221, -inf
    %1227 = vmax.xlane.f32.xlu0 %v1226
    %v1228 = vpop.xlane.xlu0 %1227
    %v1229 = vsub.f32 %v1219, %v1225
    %v1230 = vsub.f32 %v1221, %v1228
    %v1231 = vmul.f32 %v1229, 1.442695
    %v1232 = vpow.pop %v1231
    %v1233 = vmul.f32 %v1230, 1.442695
    %v1234 = vpow.pop %v1233
    %v1235 = vsel %vm268, %v1232, 0.0
    %1236 = vadd.xlane.f32.xlu0 %v1235
    %v1237 = vpop.xlane.xlu0 %1236
    %v1238 = vsel %vm268, %v1234, 0.0
    %1239 = vadd.xlane.f32.xlu0 %v1238
    %v1240 = vpop.xlane.xlu0 %1239
    %v1241 = vrcp.pop %v1237
    %v1242 = vrcp.pop %v1240
    %v1243 = vmul.f32 %v1232, %v1241
    %v1244 = vmul.f32 %v1234, %v1242
    %v1245 = vpack.c.bf16 %v1244, %v1243
    %1246 = vrot.lane.b32.xlu0 %v1046, 104
    %v1247 = vpop.permute.xlu0 %1246
    %v1250 = vsel %vm268, %v1245, 0
    %1252 = vmatpush.bf16.msra.mxu0 0
    %1253 = vmatpush.bf16.msra.mxu0 0
    %1254 = vmatpush.bf16.msra.mxu0 0
    %1255 = vmatpush.bf16.msra.mxu0 0
    %1256 = vmatpush.bf16.msra.mxu0 0
    %1257 = vmatpush.bf16.msra.mxu0 0
    %1258 = vmatpush.bf16.msra.mxu0 0
    %1259 = vmatpush.bf16.msra.mxu0 %v1247
    %1260 = vmatmul.bf16.gmra.mxu0 %v1250
    %v1261 = vpop.f32.mrf.mxu0
    %v1262 = vadd.f32 0.0, %v1261
    %v1263 = vpop.f32.mrf.mxu0
    %v1264 = vadd.f32 0.0, %v1263
    %1265 = vdwg.mxu0
    %1268 = vrot.lane.b32.xlu0 %v1128, 8
    %v1269 = vpop.permute.xlu0 %1268
    %1270 = vrot.lane.b32.xlu0 %v1130, 8
    %v1271 = vpop.permute.xlu0 %1270
    %1276 = vrot.lane.b32.xlu0 %v1195, 16
    %v1277 = vpop.permute.xlu0 %1276
    %1278 = vrot.lane.b32.xlu0 %v1197, 16
    %v1279 = vpop.permute.xlu0 %1278
    %1284 = vrot.lane.b32.xlu0 %v1262, 24
    %v1285 = vpop.permute.xlu0 %1284
    %1286 = vrot.lane.b32.xlu0 %v1264, 24
    %v1287 = vpop.permute.xlu0 %1286
    %1292 = vrot.lane.b32.xlu0 %v1039, 32
    %v1293 = vpop.permute.xlu0 %1292
    %1294 = vrot.lane.b32.xlu0 %v1040, 32
    %v1295 = vpop.permute.xlu0 %1294
    %1300 = vrot.lane.b32.xlu0 %v1109, 48
    %v1301 = vpop.permute.xlu0 %1300
    %1302 = vrot.lane.b32.xlu0 %v1110, 48
    %v1303 = vpop.permute.xlu0 %1302
    %1308 = vrot.lane.b32.xlu0 %v1176, 64
    %v1309 = vpop.permute.xlu0 %1308
    %1310 = vrot.lane.b32.xlu0 %v1177, 64
    %v1311 = vpop.permute.xlu0 %1310
    %1316 = vrot.lane.b32.xlu0 %v1243, 80
    %v1317 = vpop.permute.xlu0 %1316
    %1318 = vrot.lane.b32.xlu0 %v1244, 80
    %v1319 = vpop.permute.xlu0 %1318
    %v1322 = vsel %vm998, %v1061, %v1269
    %v1323 = vsel %vm998, %v1063, %v1271
    %v1324 = vsel %vm268, %v1322, %v1277
    %v1325 = vsel %vm268, %v1323, %v1279
    %vm1326 = vcmask 195584
    %v1327 = vsel %vm1326, %v1324, %v1285
    %v1328 = vsel %vm1326, %v1325, %v1287
    %v1329 = vsel %vm162, %v1327, %v1293
    %v1330 = vsel %vm162, %v1328, %v1295
    %vm1331 = vcmask 392192
    %v1332 = vsel %vm1331, %v1329, %v1301
    %v1333 = vsel %vm1331, %v1330, %v1303
    %vm1334 = vcmask 523264
    %v1335 = vsel %vm1334, %v1332, %v1309
    %v1336 = vsel %vm1334, %v1333, %v1311
    %vm1337 = vcmask 654336
    %v1338 = vsel %vm1337, %v1335, %v1317
    %v1339 = vsel %vm1337, %v1336, %v1319
    %vm1340 = vcmask 785408
    %v1341 = vsel %vm1340, %v1338, 0.0
    %v1342 = vsel %vm1340, %v1339, 0.0
    %1343 = vst [vmem:[%s8] sm:$0xff] %v1341
    %1344 = vst [vmem:[%s8 + $0x8] sm:$0xff] %v1342
    // Predicated region
    $region62: #{rpe_multi_head_attention.1} parent=1 // pred_check
      _
    $region63: #{rpe_multi_head_attention.1} parent=1 // pred_check_branch
      %1346 = sbr.rel (0) target = $region65
    $region64: #{rpe_multi_head_attention.1} parent=1 // pred_region
      _
    $region65: #{rpe_multi_head_attention.1} parent=1 // pred_fallthru
      _
    // Predicated region
    $region66: #{rpe_multi_head_attention.1} parent=1 // pred_check
      _
    $region67: #{rpe_multi_head_attention.1} parent=1 // pred_check_branch
      %1348 = sbr.rel (0) target = $region69
    $region68: #{rpe_multi_head_attention.1} parent=1 // pred_region
      _
    $region69: #{rpe_multi_head_attention.1} parent=1 // pred_fallthru
      _
    %1349 = vsyncpa [#allocation3], 1
    %1350 = vsyncpa [#allocation5], 1
    %1351 = vsyncpa [#allocation8], 1
    %1352 = vsyncpa [#allocation11], 1

</llo_original>
